<compile_context>
chip_gen: v6e
topology: v6e:2x2x1
jax: 0.10.0
libtpu: 0.0.40
codegen_flags: <defaults>
</compile_context>

<pallas_src>
import functools

import jax
import jax.numpy as jnp
from jax.experimental import pallas as pl
from jax.experimental.pallas import tpu as pltpu


def _self_attention_kernel(v_ref, k_ref, q_ref,
                           wv_ref, wk_ref, wq_ref, wo_ref, bo_ref,
                           o_ref, merge_ref, *, compute_dtype):
    # Per-grid-step blocks:
    #   v_ref/k_ref/q_ref : (Bblk, H, L, D)   (compute_dtype)
    #   wv/wk/wq          : (D, D)            pre-transposed -> y = x @ w
    #   wo                : (E, E)            pre-transposed fc_out weight
    #   bo                : (1, E)            float32
    #   o_ref             : (Bblk, Lq, E)
    #   merge_ref         : (Bblk, Lq, E)     VMEM scratch for head merge
    B, H, Lv, D = v_ref.shape
    Lk = k_ref.shape[2]
    Lq = q_ref.shape[2]
    E = H * D
    cd = compute_dtype

    # Fused per-head projections: one big (B*H*L, D) @ (D, D) matmul per
    # tensor (the shared per-head weight is applied to all heads at once).
    values = jnp.dot(v_ref[...].reshape(B * H * Lv, D), wv_ref[...],
                     preferred_element_type=jnp.float32)          # (B*H*Lv, D) f32
    keys = jnp.dot(k_ref[...].reshape(B * H * Lk, D), wk_ref[...],
                   preferred_element_type=jnp.float32)            # (B*H*Lk, D) f32
    queries = jnp.dot(q_ref[...].reshape(B * H * Lq, D), wq_ref[...],
                      preferred_element_type=jnp.float32)         # (B*H*Lq, D) f32

    G = B * H
    # Fold the 1/sqrt(embed_size) scale (PyTorch module semantics) into Q.
    scale = 1.0 / (float(E) ** 0.5)
    qh = (queries * scale).reshape(G, Lq, D).astype(cd)
    kh = keys.reshape(G, Lk, D).astype(cd)
    vh = values.reshape(G, Lv, D).astype(cd)

    # Scores + numerically-safe softmax over the key axis (float32 math).
    energy = jnp.einsum('gqd,gkd->gqk', qh, kh,
                        preferred_element_type=jnp.float32)       # (G, Lq, Lk)
    m = jnp.max(energy, axis=-1, keepdims=True)
    p = jnp.exp(energy - m)
    attn = p * pl.reciprocal(jnp.sum(p, axis=-1, keepdims=True), approx=True)

    # Attention-weighted values.
    ctx = jnp.einsum('gqk,gkd->gqd', attn.astype(cd), vh,
                     preferred_element_type=jnp.float32)          # (G, Lq, D)

    # Merge heads -> (B, Lq, E) via cheap static lane-sliced stores into a
    # VMEM scratch (avoids minor-dim concat / 4D transpose in the kernel).
    ctx_cd = ctx.astype(cd).reshape(B, H, Lq, D)
    for h in range(H):                       # H is static; unrolled at trace
        merge_ref[:, :, h * D:(h + 1) * D] = ctx_cd[:, h]

    # Single fused fc_out matmul with K = E (no per-head matmul loop).
    merged = merge_ref[...].reshape(B * Lq, E)
    result = jnp.dot(merged, wo_ref[...],
                     preferred_element_type=jnp.float32) + bo_ref[...]
    o_ref[...] = result.reshape(B, Lq, E).astype(o_ref.dtype)


def self_attention(value, key, query, wv, wk, wq, wo, bo, *, heads,
                   block_n=None, compute_dtype=jnp.bfloat16):
    """value/key/query: (N, L, E) float32. Returns (N, Lq, E) float32."""
    N, Lq, E = query.shape
    Lv = value.shape[1]
    Lk = key.shape[1]
    H = heads
    D = E // H
    out_dtype = query.dtype

    # Block several batch elements per grid step so matmul M = Bblk*H*L is
    # large enough to feed the MXU; pad N up to a multiple of the block.
    if block_n is None:
        block_n = max(1, min(N, pl.cdiv(256, max(1, H * Lq))))
    n_blocks = pl.cdiv(N, block_n)
    Npad = n_blocks * block_n

    def split_heads(x, L):
        x = x.reshape(N, L, H, D).transpose(0, 2, 1, 3)   # (N, H, L, D)
        if Npad != N:
            x = jnp.pad(x, ((0, Npad - N), (0, 0), (0, 0), (0, 0)))
        return x.astype(compute_dtype)

    v4 = split_heads(value, Lv)
    k4 = split_heads(key, Lk)
    q4 = split_heads(query, Lq)

    # Pre-transpose all weights once in the wrapper: kernel does plain x @ w.
    wv_t = wv.T.astype(compute_dtype)          # (D, D)
    wk_t = wk.T.astype(compute_dtype)
    wq_t = wq.T.astype(compute_dtype)
    wo_t = wo.T.astype(compute_dtype)          # (E, E)
    bo_r = bo.reshape(1, E).astype(jnp.float32)

    kernel = functools.partial(_self_attention_kernel,
                               compute_dtype=compute_dtype)

    out = pl.pallas_call(
        kernel,
        out_shape=jax.ShapeDtypeStruct((Npad, Lq, E), out_dtype),
        grid_spec=pltpu.PrefetchScalarGridSpec(
            num_scalar_prefetch=0,
            grid=(n_blocks,),
            in_specs=[
                pl.BlockSpec((block_n, H, Lv, D), lambda n: (n, 0, 0, 0)),
                pl.BlockSpec((block_n, H, Lk, D), lambda n: (n, 0, 0, 0)),
                pl.BlockSpec((block_n, H, Lq, D), lambda n: (n, 0, 0, 0)),
                pl.BlockSpec((D, D), lambda n: (0, 0)),
                pl.BlockSpec((D, D), lambda n: (0, 0)),
                pl.BlockSpec((D, D), lambda n: (0, 0)),
                pl.BlockSpec((E, E), lambda n: (0, 0)),
                pl.BlockSpec((1, E), lambda n: (0, 0)),
            ],
            out_specs=pl.BlockSpec((block_n, Lq, E), lambda n: (n, 0, 0)),
            scratch_shapes=[pltpu.VMEM((block_n, Lq, E), compute_dtype)],
        ),
        compiler_params=pltpu.CompilerParams(
            dimension_semantics=("parallel",)),
    )(v4, k4, q4, wv_t, wk_t, wq_t, wo_t, bo_r)
    return out[:N]


def _reference(value, key, query, wv, wk, wq, wo, bo, *, heads):
    """Plain-JAX replica of the PyTorch forward, for verification."""
    N, Lq, E = query.shape
    D = E // heads
    H = heads
    v = value.reshape(N, value.shape[1], H, D)
    k = key.reshape(N, key.shape[1], H, D)
    q = query.reshape(N, Lq, H, D)
    v = jnp.einsum('nlhd,ed->nlhe', v, wv)
    k = jnp.einsum('nlhd,ed->nlhe', k, wk)
    q = jnp.einsum('nlhd,ed->nlhe', q, wq)
    energy = jnp.einsum('nqhd,nkhd->nhqk', q, k)
    attn = jax.nn.softmax(energy / (E ** 0.5), axis=3)
    out = jnp.einsum('nhql,nlhd->nqhd', attn, v).reshape(N, Lq, H * D)
    return out @ wo.T + bo


if __name__ == "__main__":
    embed_size = 32
    heads = 4
    head_dim = embed_size // heads
    N = 2
    seq = 8

    key0 = jax.random.PRNGKey(0)
    kv, kk, kq, kwv, kwk, kwq, kwo, kbo = jax.random.split(key0, 8)

    value = jax.random.normal(kv, (N, seq, embed_size), dtype=jnp.float32)
    key_ = jax.random.normal(kk, (N, seq, embed_size), dtype=jnp.float32)
    query = jax.random.normal(kq, (N, seq, embed_size), dtype=jnp.float32)

    # PyTorch Linear default init: U(-1/sqrt(fan_in), 1/sqrt(fan_in)).
    b_head = 1.0 / (head_dim ** 0.5)
    b_out = 1.0 / (embed_size ** 0.5)
    wv = jax.random.uniform(kwv, (head_dim, head_dim), jnp.float32, -b_head, b_head)
    wk = jax.random.uniform(kwk, (head_dim, head_dim), jnp.float32, -b_head, b_head)
    wq = jax.random.uniform(kwq, (head_dim, head_dim), jnp.float32, -b_head, b_head)
    wo = jax.random.uniform(kwo, (embed_size, heads * head_dim), jnp.float32, -b_out, b_out)
    bo = jax.random.uniform(kbo, (embed_size,), jnp.float32, -b_out, b_out)

    ref = _reference(value, key_, query, wv, wk, wq, wo, bo, heads=heads)

    # Float32 compute path: tight check against the PyTorch-equivalent reference.
    out_f32 = jax.block_until_ready(
        self_attention(value, key_, query, wv, wk, wq, wo, bo,
                       heads=heads, compute_dtype=jnp.float32))
    assert out_f32.shape == (N, seq, embed_size)
    assert jnp.allclose(out_f32, ref, atol=2e-3, rtol=2e-3), (
        f"f32 max abs err {jnp.max(jnp.abs(out_f32 - ref))}")

    # bfloat16 MXU path (performance config): looser tolerance vs f32 reference.
    out_bf16 = jax.block_until_ready(
        self_attention(value, key_, query, wv, wk, wq, wo, bo,
                       heads=heads, compute_dtype=jnp.bfloat16))
    assert out_bf16.shape == (N, seq, embed_size)
    assert jnp.allclose(out_bf16, ref, atol=3e-2, rtol=3e-2), (
        f"bf16 max abs err {jnp.max(jnp.abs(out_bf16 - ref))}")

    print("KERNEL_OK")
</pallas_src>

<mosaic_0001>
module attributes {stable_mosaic.version = 11 : i64} {
  func.func @_self_attention_kernel(%arg0: i32, %arg1: memref<2x4x8x8xf32, #tpu.memory_space<vmem>>, %arg2: memref<2x4x8x8xf32, #tpu.memory_space<vmem>>, %arg3: memref<2x4x8x8xf32, #tpu.memory_space<vmem>>, %arg4: memref<8x8xf32, #tpu.memory_space<vmem>>, %arg5: memref<8x8xf32, #tpu.memory_space<vmem>>, %arg6: memref<8x8xf32, #tpu.memory_space<vmem>>, %arg7: memref<32x32xf32, #tpu.memory_space<vmem>>, %arg8: memref<1x32xf32, #tpu.memory_space<vmem>>, %arg9: memref<2x8x32xf32, #tpu.memory_space<vmem>>, %arg10: memref<2x8x32xf32, #tpu.memory_space<vmem>>) attributes {dimension_semantics = [#tpu.dimension_semantics<parallel>], iteration_bounds = array<i64: 1>, scalar_prefetch = 0 : i64, scratch_operands = 1 : i64, tpu.core_type = #tpu.core_type<tc>, window_params = [{transform_indices = @transform_0, window_bounds = array<i64: 2, 4, 8, 8>}, {transform_indices = @transform_1, window_bounds = array<i64: 2, 4, 8, 8>}, {transform_indices = @transform_2, window_bounds = array<i64: 2, 4, 8, 8>}, {pipeline_mode = #tpu.pipeline_mode<synchronous>, transform_indices = @transform_3, window_bounds = array<i64: 8, 8>}, {pipeline_mode = #tpu.pipeline_mode<synchronous>, transform_indices = @transform_4, window_bounds = array<i64: 8, 8>}, {pipeline_mode = #tpu.pipeline_mode<synchronous>, transform_indices = @transform_5, window_bounds = array<i64: 8, 8>}, {pipeline_mode = #tpu.pipeline_mode<synchronous>, transform_indices = @transform_6, window_bounds = array<i64: 32, 32>}, {pipeline_mode = #tpu.pipeline_mode<synchronous>, transform_indices = @transform_7, window_bounds = array<i64: 1, 32>}, {transform_indices = @transform_8, window_bounds = array<i64: 2, 8, 32>}]} {
    %c0 = arith.constant 0 : index
    %c0_0 = arith.constant 0 : index
    %c0_1 = arith.constant 0 : index
    %c0_2 = arith.constant 0 : index
    %0 = vector.load %arg1[%c0, %c0_0, %c0_1, %c0_2] : memref<2x4x8x8xf32, #tpu.memory_space<vmem>>, vector<2x4x8x8xf32>
    %1 = vector.shape_cast %0 : vector<2x4x8x8xf32> to vector<64x8xf32>
    %c0_3 = arith.constant 0 : index
    %c0_4 = arith.constant 0 : index
    %2 = vector.load %arg4[%c0_3, %c0_4] : memref<8x8xf32, #tpu.memory_space<vmem>>, vector<8x8xf32>
    %cst = arith.constant dense<0.000000e+00> : vector<64x8xf32>
    %3 = tpu.matmul %1, %2, %cst {dimension_numbers = #tpu.dot_dimension_numbers<[1], [0], [0], [1], [0, 0, 1, 1], [], []>} : vector<64x8xf32>, vector<8x8xf32>, vector<64x8xf32> -> vector<64x8xf32>
    %c0_5 = arith.constant 0 : index
    %c0_6 = arith.constant 0 : index
    %c0_7 = arith.constant 0 : index
    %c0_8 = arith.constant 0 : index
    %4 = vector.load %arg2[%c0_5, %c0_6, %c0_7, %c0_8] : memref<2x4x8x8xf32, #tpu.memory_space<vmem>>, vector<2x4x8x8xf32>
    %5 = vector.shape_cast %4 : vector<2x4x8x8xf32> to vector<64x8xf32>
    %c0_9 = arith.constant 0 : index
    %c0_10 = arith.constant 0 : index
    %6 = vector.load %arg5[%c0_9, %c0_10] : memref<8x8xf32, #tpu.memory_space<vmem>>, vector<8x8xf32>
    %cst_11 = arith.constant dense<0.000000e+00> : vector<64x8xf32>
    %7 = tpu.matmul %5, %6, %cst_11 {dimension_numbers = #tpu.dot_dimension_numbers<[1], [0], [0], [1], [0, 0, 1, 1], [], []>} : vector<64x8xf32>, vector<8x8xf32>, vector<64x8xf32> -> vector<64x8xf32>
    %c0_12 = arith.constant 0 : index
    %c0_13 = arith.constant 0 : index
    %c0_14 = arith.constant 0 : index
    %c0_15 = arith.constant 0 : index
    %8 = vector.load %arg3[%c0_12, %c0_13, %c0_14, %c0_15] : memref<2x4x8x8xf32, #tpu.memory_space<vmem>>, vector<2x4x8x8xf32>
    %9 = vector.shape_cast %8 : vector<2x4x8x8xf32> to vector<64x8xf32>
    %c0_16 = arith.constant 0 : index
    %c0_17 = arith.constant 0 : index
    %10 = vector.load %arg6[%c0_16, %c0_17] : memref<8x8xf32, #tpu.memory_space<vmem>>, vector<8x8xf32>
    %cst_18 = arith.constant dense<0.000000e+00> : vector<64x8xf32>
    %11 = tpu.matmul %9, %10, %cst_18 {dimension_numbers = #tpu.dot_dimension_numbers<[1], [0], [0], [1], [0, 0, 1, 1], [], []>} : vector<64x8xf32>, vector<8x8xf32>, vector<64x8xf32> -> vector<64x8xf32>
    %cst_19 = arith.constant 0.176776692 : f32
    %12 = vector.broadcast %cst_19 : f32 to vector<64x8xf32>
    %13 = arith.mulf %11, %12 : vector<64x8xf32>
    %14 = vector.shape_cast %13 : vector<64x8xf32> to vector<8x8x8xf32>
    %15 = vector.shape_cast %7 : vector<64x8xf32> to vector<8x8x8xf32>
    %16 = vector.shape_cast %3 : vector<64x8xf32> to vector<8x8x8xf32>
    "tpu.trace_start"() <{level = 10 : i32, message = "gqd,gkd->gqk"}> : () -> ()
    %cst_20 = arith.constant dense<0.000000e+00> : vector<8x8x8xf32>
    %17 = tpu.matmul %14, %15, %cst_20 {dimension_numbers = #tpu.dot_dimension_numbers<[2], [2], [1], [1], [0, 0, 0, 1, 1, 1], [0], [0]>} : vector<8x8x8xf32>, vector<8x8x8xf32>, vector<8x8x8xf32> -> vector<8x8x8xf32>
    "tpu.trace_stop"() : () -> ()
    %cst_21 = arith.constant dense<0xFF800000> : vector<8x8xf32>
    %18 = vector.multi_reduction <maximumf>, %17, %cst_21 [2] : vector<8x8x8xf32> to vector<8x8xf32>
    %19 = vector.shape_cast %18 : vector<8x8xf32> to vector<8x8x1xf32>
    %20 = vector.broadcast %19 : vector<8x8x1xf32> to vector<8x8x8xf32>
    %21 = arith.subf %17, %20 : vector<8x8x8xf32>
    %22 = math.exp %21 : vector<8x8x8xf32>
    %cst_22 = arith.constant dense<0.000000e+00> : vector<8x8xf32>
    %23 = vector.multi_reduction <add>, %22, %cst_22 [2] : vector<8x8x8xf32> to vector<8x8xf32>
    %24 = vector.shape_cast %23 : vector<8x8xf32> to vector<8x8x1xf32>
    %25 = tpu.reciprocal %24 {approx = true} : vector<8x8x1xf32> -> vector<8x8x1xf32>
    %26 = vector.broadcast %25 : vector<8x8x1xf32> to vector<8x8x8xf32>
    %27 = arith.mulf %22, %26 : vector<8x8x8xf32>
    "tpu.trace_start"() <{level = 10 : i32, message = "gqk,gkd->gqd"}> : () -> ()
    %cst_23 = arith.constant dense<0.000000e+00> : vector<8x8x8xf32>
    %28 = tpu.matmul %27, %16, %cst_23 {dimension_numbers = #tpu.dot_dimension_numbers<[2], [1], [1], [2], [0, 0, 0, 1, 1, 2], [0], [0]>} : vector<8x8x8xf32>, vector<8x8x8xf32>, vector<8x8x8xf32> -> vector<8x8x8xf32>
    "tpu.trace_stop"() : () -> ()
    %29 = vector.shape_cast %28 : vector<8x8x8xf32> to vector<2x4x8x8xf32>
    %30 = vector.extract_strided_slice %29 {offsets = [0, 0, 0, 0], sizes = [2, 1, 8, 8], strides = [1, 1, 1, 1]} : vector<2x4x8x8xf32> to vector<2x1x8x8xf32>
    %31 = vector.shape_cast %30 : vector<2x1x8x8xf32> to vector<2x8x8xf32>
    %c0_24 = arith.constant 0 : index
    %c0_25 = arith.constant 0 : index
    %c0_26 = arith.constant 0 : index
    %32 = vector.load %arg10[%c0_24, %c0_25, %c0_26] : memref<2x8x32xf32, #tpu.memory_space<vmem>>, vector<2x8x8xf32>
    tpu.vector_store %arg10[%c0_24, %c0_25, %c0_26], %31 {strides = array<i32>} : memref<2x8x32xf32, #tpu.memory_space<vmem>>, vector<2x8x8xf32>,
    %33 = vector.extract_strided_slice %29 {offsets = [0, 1, 0, 0], sizes = [2, 1, 8, 8], strides = [1, 1, 1, 1]} : vector<2x4x8x8xf32> to vector<2x1x8x8xf32>
    %34 = vector.shape_cast %33 : vector<2x1x8x8xf32> to vector<2x8x8xf32>
    %c0_27 = arith.constant 0 : index
    %c0_28 = arith.constant 0 : index
    %c8 = arith.constant 8 : index
    %35 = vector.load %arg10[%c0_27, %c0_28, %c8] : memref<2x8x32xf32, #tpu.memory_space<vmem>>, vector<2x8x8xf32>
    tpu.vector_store %arg10[%c0_27, %c0_28, %c8], %34 {strides = array<i32>} : memref<2x8x32xf32, #tpu.memory_space<vmem>>, vector<2x8x8xf32>,
    %36 = vector.extract_strided_slice %29 {offsets = [0, 2, 0, 0], sizes = [2, 1, 8, 8], strides = [1, 1, 1, 1]} : vector<2x4x8x8xf32> to vector<2x1x8x8xf32>
    %37 = vector.shape_cast %36 : vector<2x1x8x8xf32> to vector<2x8x8xf32>
    %c0_29 = arith.constant 0 : index
    %c0_30 = arith.constant 0 : index
    %c16 = arith.constant 16 : index
    %38 = vector.load %arg10[%c0_29, %c0_30, %c16] : memref<2x8x32xf32, #tpu.memory_space<vmem>>, vector<2x8x8xf32>
    tpu.vector_store %arg10[%c0_29, %c0_30, %c16], %37 {strides = array<i32>} : memref<2x8x32xf32, #tpu.memory_space<vmem>>, vector<2x8x8xf32>,
    %39 = vector.extract_strided_slice %29 {offsets = [0, 3, 0, 0], sizes = [2, 1, 8, 8], strides = [1, 1, 1, 1]} : vector<2x4x8x8xf32> to vector<2x1x8x8xf32>
    %40 = vector.shape_cast %39 : vector<2x1x8x8xf32> to vector<2x8x8xf32>
    %c0_31 = arith.constant 0 : index
    %c0_32 = arith.constant 0 : index
    %c24 = arith.constant 24 : index
    %41 = vector.load %arg10[%c0_31, %c0_32, %c24] : memref<2x8x32xf32, #tpu.memory_space<vmem>>, vector<2x8x8xf32>
    tpu.vector_store %arg10[%c0_31, %c0_32, %c24], %40 {strides = array<i32>} : memref<2x8x32xf32, #tpu.memory_space<vmem>>, vector<2x8x8xf32>,
    %c0_33 = arith.constant 0 : index
    %c0_34 = arith.constant 0 : index
    %c0_35 = arith.constant 0 : index
    %42 = vector.load %arg10[%c0_33, %c0_34, %c0_35] : memref<2x8x32xf32, #tpu.memory_space<vmem>>, vector<2x8x32xf32>
    %43 = vector.shape_cast %42 : vector<2x8x32xf32> to vector<16x32xf32>
    %c0_36 = arith.constant 0 : index
    %c0_37 = arith.constant 0 : index
    %44 = vector.load %arg7[%c0_36, %c0_37] : memref<32x32xf32, #tpu.memory_space<vmem>>, vector<32x32xf32>
    %cst_38 = arith.constant dense<0.000000e+00> : vector<16x32xf32>
    %45 = tpu.matmul %43, %44, %cst_38 {dimension_numbers = #tpu.dot_dimension_numbers<[1], [0], [0], [1], [0, 0, 1, 1], [], []>} : vector<16x32xf32>, vector<32x32xf32>, vector<16x32xf32> -> vector<16x32xf32>
    %c0_39 = arith.constant 0 : index
    %c0_40 = arith.constant 0 : index
    %46 = vector.load %arg8[%c0_39, %c0_40] : memref<1x32xf32, #tpu.memory_space<vmem>>, vector<1x32xf32>
    %47 = vector.broadcast %46 : vector<1x32xf32> to vector<16x32xf32>
    %48 = arith.addf %45, %47 : vector<16x32xf32>
    %49 = vector.shape_cast %48 : vector<16x32xf32> to vector<2x8x32xf32>
    %c0_41 = arith.constant 0 : index
    %c0_42 = arith.constant 0 : index
    %c0_43 = arith.constant 0 : index
    %50 = vector.load %arg9[%c0_41, %c0_42, %c0_43] : memref<2x8x32xf32, #tpu.memory_space<vmem>>, vector<2x8x32xf32>
    tpu.vector_store %arg9[%c0_41, %c0_42, %c0_43], %49 {strides = array<i32>} : memref<2x8x32xf32, #tpu.memory_space<vmem>>, vector<2x8x32xf32>,
    return
  }
  func.func @transform_0(%arg0: i32) -> (i32, i32, i32, i32) {
    %c0_i32 = arith.constant 0 : i32
    %c0_i32_0 = arith.constant 0 : i32
    %c0_i32_1 = arith.constant 0 : i32
    %c0_i32_2 = arith.constant 0 : i32
    return %arg0, %c0_i32, %c0_i32_0, %c0_i32_1 : i32, i32, i32, i32
  }
  func.func @transform_1(%arg0: i32) -> (i32, i32, i32, i32) {
    %c0_i32 = arith.constant 0 : i32
    %c0_i32_0 = arith.constant 0 : i32
    %c0_i32_1 = arith.constant 0 : i32
    %c0_i32_2 = arith.constant 0 : i32
    return %arg0, %c0_i32, %c0_i32_0, %c0_i32_1 : i32, i32, i32, i32
  }
  func.func @transform_2(%arg0: i32) -> (i32, i32, i32, i32) {
    %c0_i32 = arith.constant 0 : i32
    %c0_i32_0 = arith.constant 0 : i32
    %c0_i32_1 = arith.constant 0 : i32
    %c0_i32_2 = arith.constant 0 : i32
    return %arg0, %c0_i32, %c0_i32_0, %c0_i32_1 : i32, i32, i32, i32
  }
  func.func @transform_3(%arg0: i32) -> (i32, i32) {
    %c0_i32 = arith.constant 0 : i32
    %c0_i32_0 = arith.constant 0 : i32
    %c0_i32_1 = arith.constant 0 : i32
    return %c0_i32, %c0_i32_0 : i32, i32
  }
  func.func @transform_4(%arg0: i32) -> (i32, i32) {
    %c0_i32 = arith.constant 0 : i32
    %c0_i32_0 = arith.constant 0 : i32
    %c0_i32_1 = arith.constant 0 : i32
    return %c0_i32, %c0_i32_0 : i32, i32
  }
  func.func @transform_5(%arg0: i32) -> (i32, i32) {
    %c0_i32 = arith.constant 0 : i32
    %c0_i32_0 = arith.constant 0 : i32
    %c0_i32_1 = arith.constant 0 : i32
    return %c0_i32, %c0_i32_0 : i32, i32
  }
  func.func @transform_6(%arg0: i32) -> (i32, i32) {
    %c0_i32 = arith.constant 0 : i32
    %c0_i32_0 = arith.constant 0 : i32
    %c0_i32_1 = arith.constant 0 : i32
    return %c0_i32, %c0_i32_0 : i32, i32
  }
  func.func @transform_7(%arg0: i32) -> (i32, i32) {
    %c0_i32 = arith.constant 0 : i32
    %c0_i32_0 = arith.constant 0 : i32
    %c0_i32_1 = arith.constant 0 : i32
    return %c0_i32, %c0_i32_0 : i32, i32
  }
  func.func @transform_8(%arg0: i32) -> (i32, i32, i32) {
    %c0_i32 = arith.constant 0 : i32
    %c0_i32_0 = arith.constant 0 : i32
    %c0_i32_1 = arith.constant 0 : i32
    return %arg0, %c0_i32, %c0_i32_0 : i32, i32, i32
  }
}

</mosaic_0001>

<llo_original>
// kernel: tpu_custom_call.1
$region0: #{tpu_custom_call.1}
  #allocation0 [shape = 'u32[]', space=smem, size = 0x4, offset = 0x4, fixed_abs, tag = 'smem constant byte address 0x4 - core index']
  #allocation1 [shape = 'u32[144,128]{1,0:T(1,128)}', space=vmem, size = 0x12000, scoped, tag = 'internal scratch']
  #allocation2 [shape = 'f32[2,8,32]{2,1,0:T(8,128)}', space=vmem, size = 0x2000, scoped, tag = 'scratch operand']
  %s0 = inlined_call_operand.hbm [shape: f32[2,4,8,8], index: 0, kind: input, shape index: {}]
  %s1 = inlined_call_operand.hbm [shape: f32[2,4,8,8], index: 1, kind: input, shape index: {}]
  %s2 = inlined_call_operand.hbm [shape: f32[2,4,8,8], index: 2, kind: input, shape index: {}]
  %s3 = inlined_call_operand.hbm [shape: f32[8,8], index: 3, kind: input, shape index: {}]
  %s4 = inlined_call_operand.hbm [shape: f32[8,8], index: 4, kind: input, shape index: {}]
  %s5 = inlined_call_operand.vmem [shape: f32[8,8], index: 5, kind: input, shape index: {}]
  %s6 = inlined_call_operand.hbm [shape: f32[32,32], index: 6, kind: input, shape index: {}]
  %s7 = inlined_call_operand.vmem [shape: f32[1,32], index: 7, kind: input, shape index: {}]
  %s8 = inlined_call_operand.hbm [shape: f32[2,8,32], index: 8, kind: output, shape index: {}]
  %s9 = sld [smem:[#allocation0]]
  $region66: #{tpu_custom_call.1} parent=0
    _
  %s11 = ssub.s32 1, %s9
  %s12 = scalar_select 0, %s11, %s9
  $region1: #{tpu_custom_call.1} parent=0
    #allocation3 [shape = 'u8[32768]{0}', space=vmem, size = 0x8000, scoped, tag = 'input window, operand 0, single buffered']
    #allocation4 [shape = 's32[1]{0}', space=sflag, size = 0x4, scoped, tag = 'scoped memory for tpu_custom_call.1']
    #allocation5 [shape = 's32[1]{0}', space=sflag, size = 0x4, scoped, tag = 'scoped memory for tpu_custom_call.1']
    #allocation6 [shape = 'u8[32768]{0}', space=vmem, size = 0x8000, scoped, tag = 'input window, operand 1, single buffered']
    #allocation7 [shape = 's32[1]{0}', space=sflag, size = 0x4, scoped, tag = 'scoped memory for tpu_custom_call.1']
    #allocation8 [shape = 'u8[32768]{0}', space=vmem, size = 0x8000, scoped, tag = 'input window, operand 2, single buffered']
    #allocation9 [shape = 'u8[4096]{0}', space=vmem, size = 0x1000, scoped, tag = 'input window, operand 3, single buffered']
    #allocation10 [shape = 's32[1]{0}', space=sflag, size = 0x4, scoped, tag = 'scoped memory for tpu_custom_call.1']
    #allocation11 [shape = 'u8[4096]{0}', space=vmem, size = 0x1000, scoped, tag = 'input window, operand 4, single buffered']
    #allocation12 [shape = 'u8[16384]{0}', space=vmem, size = 0x4000, scoped, tag = 'input window, operand 6, single buffered']
    #allocation13 [shape = 's32[1]{0}', space=sflag, size = 0x4, scoped, tag = 'scoped memory for tpu_custom_call.1']
    #allocation14 [shape = 'u8[8192]{0}', space=vmem, size = 0x2000, scoped, tag = 'output window, operand 0, single buffered']
    %13 = vsyncpa [#allocation4], 0
    %14 = vsyncpa [#allocation7], 0
    %15 = vsyncpa [#allocation10], 0
    %16 = vsyncpa [#allocation13], 0
    %17 = vsyncpa [#allocation5], 0
    // Predicated region
    $region2: #{tpu_custom_call.1} parent=1 // pred_check
      _
    $region3: #{tpu_custom_call.1} parent=1 // pred_check_branch
      %19 = sbr.rel (0) target = $region5
    $region4: #{tpu_custom_call.1} parent=1 // pred_region
      %s21 = ssub.s32 1024, 1024
      %22 = vsyncadd [#allocation4], %s21
      %s23 = sshll.u32 [#allocation3], 4
      %s24 = int_to_ptr.vmem [resolvable:$true] %s23
      %29 = dma.hbm_to_vmem [thread:$0]  %s0, 1024, %s24, [#allocation4], 128, 128, 8
    $region5: #{tpu_custom_call.1} parent=1 // pred_fallthru
      _
    // Predicated region
    $region6: #{tpu_custom_call.1} parent=1 // pred_check
      _
    $region7: #{tpu_custom_call.1} parent=1 // pred_check_branch
      %31 = sbr.rel (0) target = $region9
    $region8: #{tpu_custom_call.1} parent=1 // pred_region
      %s33 = ssub.s32 1024, 1024
      %34 = vsyncadd [#allocation7], %s33
      %s35 = sshll.u32 [#allocation6], 4
      %s36 = int_to_ptr.vmem [resolvable:$true] %s35
      %41 = dma.hbm_to_vmem [thread:$0]  %s1, 1024, %s36, [#allocation7], 128, 128, 8
    $region9: #{tpu_custom_call.1} parent=1 // pred_fallthru
      _
    // Predicated region
    $region10: #{tpu_custom_call.1} parent=1 // pred_check
      _
    $region11: #{tpu_custom_call.1} parent=1 // pred_check_branch
      %43 = sbr.rel (0) target = $region13
    $region12: #{tpu_custom_call.1} parent=1 // pred_region
      %s45 = ssub.s32 1024, 1024
      %46 = vsyncadd [#allocation7], %s45
      %s47 = sshll.u32 [#allocation8], 4
      %s48 = int_to_ptr.vmem [resolvable:$true] %s47
      %53 = dma.hbm_to_vmem [thread:$0]  %s2, 1024, %s48, [#allocation7], 128, 128, 8
    $region13: #{tpu_custom_call.1} parent=1 // pred_fallthru
      _
    // Predicated region
    $region14: #{tpu_custom_call.1} parent=1 // pred_check
      _
    $region15: #{tpu_custom_call.1} parent=1 // pred_check_branch
      %55 = sbr.rel (0) target = $region17
    $region16: #{tpu_custom_call.1} parent=1 // pred_region
      %s57 = ssub.s32 128, 128
      %58 = vsyncadd [#allocation10], %s57
      %s60 = sshll.u32 [#allocation9], 4
      %s61 = int_to_ptr.vmem [resolvable:$true] %s60
      %63 = dma.hbm_to_vmem [thread:$0]  %s3, 128, %s61, [#allocation10]
    $region17: #{tpu_custom_call.1} parent=1 // pred_fallthru
      _
    // Predicated region
    $region18: #{tpu_custom_call.1} parent=1 // pred_check
      _
    $region19: #{tpu_custom_call.1} parent=1 // pred_check_branch
      %65 = sbr.rel (0) target = $region21
    $region20: #{tpu_custom_call.1} parent=1 // pred_region
      %s67 = ssub.s32 128, 128
      %68 = vsyncadd [#allocation10], %s67
      %s70 = sshll.u32 [#allocation11], 4
      %s71 = int_to_ptr.vmem [resolvable:$true] %s70
      %73 = dma.hbm_to_vmem [thread:$0]  %s4, 128, %s71, [#allocation10]
    $region21: #{tpu_custom_call.1} parent=1 // pred_fallthru
      _
    // Predicated region
    $region22: #{tpu_custom_call.1} parent=1 // pred_check
      _
    $region23: #{tpu_custom_call.1} parent=1 // pred_check_branch
      %75 = sbr.rel (0) target = $region25
    $region24: #{tpu_custom_call.1} parent=1 // pred_region
      _
    $region25: #{tpu_custom_call.1} parent=1 // pred_fallthru
      _
    // Predicated region
    $region26: #{tpu_custom_call.1} parent=1 // pred_check
      _
    $region27: #{tpu_custom_call.1} parent=1 // pred_check_branch
      %77 = sbr.rel (0) target = $region29
    $region28: #{tpu_custom_call.1} parent=1 // pred_region
      %s79 = ssub.s32 512, 512
      %80 = vsyncadd [#allocation13], %s79
      %s81 = sshll.u32 [#allocation12], 4
      %s82 = int_to_ptr.vmem [resolvable:$true] %s81
      %87 = dma.hbm_to_vmem [thread:$0]  %s6, 512, %s82, [#allocation13], 128, 128, 8
    $region29: #{tpu_custom_call.1} parent=1 // pred_fallthru
      _
    // Predicated region
    $region30: #{tpu_custom_call.1} parent=1 // pred_check
      _
    $region31: #{tpu_custom_call.1} parent=1 // pred_check_branch
      %89 = sbr.rel (0) target = $region33
    $region32: #{tpu_custom_call.1} parent=1 // pred_region
      _
    $region33: #{tpu_custom_call.1} parent=1 // pred_fallthru
      _
    // Predicated region
    $region34: #{tpu_custom_call.1} parent=1 // pred_check
      _
    $region35: #{tpu_custom_call.1} parent=1 // pred_check_branch
      %91 = sbr.rel (0) target = $region37
    $region36: #{tpu_custom_call.1} parent=1 // pred_region
      %92 = dma.done [#allocation4], 1024
    $region37: #{tpu_custom_call.1} parent=1 // pred_fallthru
      _
    // Predicated region
    $region38: #{tpu_custom_call.1} parent=1 // pred_check
      _
    $region39: #{tpu_custom_call.1} parent=1 // pred_check_branch
      %94 = sbr.rel (0) target = $region41
    $region40: #{tpu_custom_call.1} parent=1 // pred_region
      %95 = dma.done [#allocation7], 1024
    $region41: #{tpu_custom_call.1} parent=1 // pred_fallthru
      _
    // Predicated region
    $region42: #{tpu_custom_call.1} parent=1 // pred_check
      _
    $region43: #{tpu_custom_call.1} parent=1 // pred_check_branch
      %97 = sbr.rel (0) target = $region45
    $region44: #{tpu_custom_call.1} parent=1 // pred_region
      %98 = dma.done [#allocation7], 1024
    $region45: #{tpu_custom_call.1} parent=1 // pred_fallthru
      _
    // Predicated region
    $region46: #{tpu_custom_call.1} parent=1 // pred_check
      _
    $region47: #{tpu_custom_call.1} parent=1 // pred_check_branch
      %100 = sbr.rel (0) target = $region49
    $region48: #{tpu_custom_call.1} parent=1 // pred_region
      %101 = dma.done [#allocation10], 128
    $region49: #{tpu_custom_call.1} parent=1 // pred_fallthru
      _
    // Predicated region
    $region50: #{tpu_custom_call.1} parent=1 // pred_check
      _
    $region51: #{tpu_custom_call.1} parent=1 // pred_check_branch
      %103 = sbr.rel (0) target = $region53
    $region52: #{tpu_custom_call.1} parent=1 // pred_region
      %104 = dma.done [#allocation10], 128
    $region53: #{tpu_custom_call.1} parent=1 // pred_fallthru
      _
    // Predicated region
    $region54: #{tpu_custom_call.1} parent=1 // pred_check
      _
    $region55: #{tpu_custom_call.1} parent=1 // pred_check_branch
      %106 = sbr.rel (0) target = $region57
    $region56: #{tpu_custom_call.1} parent=1 // pred_region
      %107 = dma.done [#allocation13], 512
    $region57: #{tpu_custom_call.1} parent=1 // pred_fallthru
      _
    %v108 = vld [vmem:[#allocation3] sm:$0xff]
    %v109 = vld [vmem:[#allocation3 + $0x8] sm:$0xff]
    %v110 = vld [vmem:[#allocation3 + $0x10] sm:$0xff]
    %v111 = vld [vmem:[#allocation3 + $0x18] sm:$0xff]
    %v112 = vld [vmem:[#allocation3 + $0x20] sm:$0xff]
    %v113 = vld [vmem:[#allocation3 + $0x28] sm:$0xff]
    %v114 = vld [vmem:[#allocation3 + $0x30] sm:$0xff]
    %v115 = vld [vmem:[#allocation3 + $0x38] sm:$0xff]
    %v116 = vld [vmem:[#allocation9] sm:$0xff]
    %vm117 = vcmask 64512
    %v119 = vsel %vm117, %v108, 0
    %v122 = vsel %vm117, %v109, 0
    %v125 = vsel %vm117, %v110, 0
    %v128 = vsel %vm117, %v111, 0
    %v131 = vsel %vm117, %v112, 0
    %v134 = vsel %vm117, %v113, 0
    %v137 = vsel %vm117, %v114, 0
    %v140 = vsel %vm117, %v115, 0
    %142 = vmatprep.subr.mxu0 0.0
    %143 = vmatpush1.msra.mxu0 0.0
    %144 = vmatprep.subr.mxu0 0.0
    %145 = vmatpush1.msra.mxu0 0.0
    %146 = vmatprep.subr.mxu0 0.0
    %147 = vmatpush1.msra.mxu0 0.0
    %148 = vmatprep.subr.mxu0 0.0
    %149 = vmatpush1.msra.mxu0 0.0
    %150 = vmatprep.subr.mxu0 0.0
    %151 = vmatpush1.msra.mxu0 0.0
    %152 = vmatprep.subr.mxu0 0.0
    %153 = vmatpush1.msra.mxu0 0.0
    %154 = vmatprep.subr.mxu0 0.0
    %155 = vmatpush1.msra.mxu0 0.0
    %156 = vmatprep.subr.mxu0 0.0
    %157 = vmatpush1.msra.mxu0 0.0
    %158 = vmatprep.subr.mxu0 0.0
    %159 = vmatpush1.msra.mxu0 0.0
    %160 = vmatprep.subr.mxu0 0.0
    %161 = vmatpush1.msra.mxu0 0.0
    %162 = vmatprep.subr.mxu0 0.0
    %163 = vmatpush1.msra.mxu0 0.0
    %164 = vmatprep.subr.mxu0 0.0
    %165 = vmatpush1.msra.mxu0 0.0
    %166 = vmatprep.subr.mxu0 0.0
    %167 = vmatpush1.msra.mxu0 0.0
    %168 = vmatprep.subr.mxu0 0.0
    %169 = vmatpush1.msra.mxu0 0.0
    %170 = vmatprep.subr.mxu0 0.0
    %171 = vmatpush1.msra.mxu0 0.0
    %172 = vmatprep.subr.mxu0 0.0
    %173 = vmatpush1.msra.mxu0 %v116
    %174 = vmatprep.subr.mxu0 0.0
    %175 = vmatpush2.msra.mxu0 0.0
    %176 = vmatprep.subr.mxu0 0.0
    %177 = vmatpush2.msra.mxu0 0.0
    %178 = vmatprep.subr.mxu0 0.0
    %179 = vmatpush2.msra.mxu0 0.0
    %180 = vmatprep.subr.mxu0 0.0
    %181 = vmatpush2.msra.mxu0 0.0
    %182 = vmatprep.subr.mxu0 0.0
    %183 = vmatpush2.msra.mxu0 0.0
    %184 = vmatprep.subr.mxu0 0.0
    %185 = vmatpush2.msra.mxu0 0.0
    %186 = vmatprep.subr.mxu0 0.0
    %187 = vmatpush2.msra.mxu0 0.0
    %188 = vmatprep.subr.mxu0 0.0
    %189 = vmatpush2.msra.mxu0 0.0
    %190 = vmatprep.subr.mxu0 0.0
    %191 = vmatpush2.msra.mxu0 0.0
    %192 = vmatprep.subr.mxu0 0.0
    %193 = vmatpush2.msra.mxu0 0.0
    %194 = vmatprep.subr.mxu0 0.0
    %195 = vmatpush2.msra.mxu0 0.0
    %196 = vmatprep.subr.mxu0 0.0
    %197 = vmatpush2.msra.mxu0 0.0
    %198 = vmatprep.subr.mxu0 0.0
    %199 = vmatpush2.msra.mxu0 0.0
    %200 = vmatprep.subr.mxu0 0.0
    %201 = vmatpush2.msra.mxu0 0.0
    %202 = vmatprep.subr.mxu0 0.0
    %203 = vmatpush2.msra.mxu0 0.0
    %204 = vmatprep.subr.mxu0 0.0
    %205 = vmatpush2.msra.mxu0 0.0
    %206 = vmatprep.mubr.f32.mxu0 0.0
    %207 = vmatmul.mubr.f32.gmra.mxu0 %v119
    %v208 = vpop.f32.mrf.mxu0
    %v209 = vadd.f32 0.0, %v208
    %v210 = vpop.f32.mrf.mxu0
    %211 = vmatprep.mubr.f32.mxu0 0.0
    %212 = vmatmul.mubr.f32.gmra.mxu0 %v122
    %v213 = vpop.f32.mrf.mxu0
    %v214 = vadd.f32 0.0, %v213
    %v215 = vpop.f32.mrf.mxu0
    %216 = vmatprep.mubr.f32.mxu0 0.0
    %217 = vmatmul.mubr.f32.gmra.mxu0 %v125
    %v218 = vpop.f32.mrf.mxu0
    %v219 = vadd.f32 0.0, %v218
    %v220 = vpop.f32.mrf.mxu0
    %221 = vmatprep.mubr.f32.mxu0 0.0
    %222 = vmatmul.mubr.f32.gmra.mxu0 %v128
    %v223 = vpop.f32.mrf.mxu0
    %v224 = vadd.f32 0.0, %v223
    %v225 = vpop.f32.mrf.mxu0
    %226 = vmatprep.mubr.f32.mxu0 0.0
    %227 = vmatmul.mubr.f32.gmra.mxu0 %v131
    %v228 = vpop.f32.mrf.mxu0
    %v229 = vadd.f32 0.0, %v228
    %v230 = vpop.f32.mrf.mxu0
    %231 = vmatprep.mubr.f32.mxu0 0.0
    %232 = vmatmul.mubr.f32.gmra.mxu0 %v134
    %v233 = vpop.f32.mrf.mxu0
    %v234 = vadd.f32 0.0, %v233
    %v235 = vpop.f32.mrf.mxu0
    %236 = vmatprep.mubr.f32.mxu0 0.0
    %237 = vmatmul.mubr.f32.gmra.mxu0 %v137
    %v238 = vpop.f32.mrf.mxu0
    %v239 = vadd.f32 0.0, %v238
    %v240 = vpop.f32.mrf.mxu0
    %241 = vmatprep.mubr.f32.mxu0 0.0
    %242 = vmatmul.mubr.f32.gmra.mxu0 %v140
    %v243 = vpop.f32.mrf.mxu0
    %v244 = vadd.f32 0.0, %v243
    %v245 = vpop.f32.mrf.mxu0
    %246 = vdwg.mxu0
    %v247 = vld [vmem:[#allocation6] sm:$0xff]
    %v248 = vld [vmem:[#allocation6 + $0x8] sm:$0xff]
    %v249 = vld [vmem:[#allocation6 + $0x10] sm:$0xff]
    %v250 = vld [vmem:[#allocation6 + $0x18] sm:$0xff]
    %v251 = vld [vmem:[#allocation6 + $0x20] sm:$0xff]
    %v252 = vld [vmem:[#allocation6 + $0x28] sm:$0xff]
    %v253 = vld [vmem:[#allocation6 + $0x30] sm:$0xff]
    %v254 = vld [vmem:[#allocation6 + $0x38] sm:$0xff]
    %v255 = vld [vmem:[#allocation11] sm:$0xff]
    %v257 = vsel %vm117, %v247, 0
    %v260 = vsel %vm117, %v248, 0
    %v263 = vsel %vm117, %v249, 0
    %v266 = vsel %vm117, %v250, 0
    %v269 = vsel %vm117, %v251, 0
    %v272 = vsel %vm117, %v252, 0
    %v275 = vsel %vm117, %v253, 0
    %v278 = vsel %vm117, %v254, 0
    %280 = vmatprep.subr.mxu0 0.0
    %281 = vmatpush1.msra.mxu0 0.0
    %282 = vmatprep.subr.mxu0 0.0
    %283 = vmatpush1.msra.mxu0 0.0
    %284 = vmatprep.subr.mxu0 0.0
    %285 = vmatpush1.msra.mxu0 0.0
    %286 = vmatprep.subr.mxu0 0.0
    %287 = vmatpush1.msra.mxu0 0.0
    %288 = vmatprep.subr.mxu0 0.0
    %289 = vmatpush1.msra.mxu0 0.0
    %290 = vmatprep.subr.mxu0 0.0
    %291 = vmatpush1.msra.mxu0 0.0
    %292 = vmatprep.subr.mxu0 0.0
    %293 = vmatpush1.msra.mxu0 0.0
    %294 = vmatprep.subr.mxu0 0.0
    %295 = vmatpush1.msra.mxu0 0.0
    %296 = vmatprep.subr.mxu0 0.0
    %297 = vmatpush1.msra.mxu0 0.0
    %298 = vmatprep.subr.mxu0 0.0
    %299 = vmatpush1.msra.mxu0 0.0
    %300 = vmatprep.subr.mxu0 0.0
    %301 = vmatpush1.msra.mxu0 0.0
    %302 = vmatprep.subr.mxu0 0.0
    %303 = vmatpush1.msra.mxu0 0.0
    %304 = vmatprep.subr.mxu0 0.0
    %305 = vmatpush1.msra.mxu0 0.0
    %306 = vmatprep.subr.mxu0 0.0
    %307 = vmatpush1.msra.mxu0 0.0
    %308 = vmatprep.subr.mxu0 0.0
    %309 = vmatpush1.msra.mxu0 0.0
    %310 = vmatprep.subr.mxu0 0.0
    %311 = vmatpush1.msra.mxu0 %v255
    %312 = vmatprep.subr.mxu0 0.0
    %313 = vmatpush2.msra.mxu0 0.0
    %314 = vmatprep.subr.mxu0 0.0
    %315 = vmatpush2.msra.mxu0 0.0
    %316 = vmatprep.subr.mxu0 0.0
    %317 = vmatpush2.msra.mxu0 0.0
    %318 = vmatprep.subr.mxu0 0.0
    %319 = vmatpush2.msra.mxu0 0.0
    %320 = vmatprep.subr.mxu0 0.0
    %321 = vmatpush2.msra.mxu0 0.0
    %322 = vmatprep.subr.mxu0 0.0
    %323 = vmatpush2.msra.mxu0 0.0
    %324 = vmatprep.subr.mxu0 0.0
    %325 = vmatpush2.msra.mxu0 0.0
    %326 = vmatprep.subr.mxu0 0.0
    %327 = vmatpush2.msra.mxu0 0.0
    %328 = vmatprep.subr.mxu0 0.0
    %329 = vmatpush2.msra.mxu0 0.0
    %330 = vmatprep.subr.mxu0 0.0
    %331 = vmatpush2.msra.mxu0 0.0
    %332 = vmatprep.subr.mxu0 0.0
    %333 = vmatpush2.msra.mxu0 0.0
    %334 = vmatprep.subr.mxu0 0.0
    %335 = vmatpush2.msra.mxu0 0.0
    %336 = vmatprep.subr.mxu0 0.0
    %337 = vmatpush2.msra.mxu0 0.0
    %338 = vmatprep.subr.mxu0 0.0
    %339 = vmatpush2.msra.mxu0 0.0
    %340 = vmatprep.subr.mxu0 0.0
    %341 = vmatpush2.msra.mxu0 0.0
    %342 = vmatprep.subr.mxu0 0.0
    %343 = vmatpush2.msra.mxu0 0.0
    %344 = vmatprep.mubr.f32.mxu0 0.0
    %345 = vmatmul.mubr.f32.gmra.mxu0 %v257
    %v346 = vpop.f32.mrf.mxu0
    %v347 = vadd.f32 0.0, %v346
    %v348 = vpop.f32.mrf.mxu0
    %349 = vmatprep.mubr.f32.mxu0 0.0
    %350 = vmatmul.mubr.f32.gmra.mxu0 %v260
    %v351 = vpop.f32.mrf.mxu0
    %v352 = vadd.f32 0.0, %v351
    %v353 = vpop.f32.mrf.mxu0
    %354 = vmatprep.mubr.f32.mxu0 0.0
    %355 = vmatmul.mubr.f32.gmra.mxu0 %v263
    %v356 = vpop.f32.mrf.mxu0
    %v357 = vadd.f32 0.0, %v356
    %v358 = vpop.f32.mrf.mxu0
    %359 = vmatprep.mubr.f32.mxu0 0.0
    %360 = vmatmul.mubr.f32.gmra.mxu0 %v266
    %v361 = vpop.f32.mrf.mxu0
    %v362 = vadd.f32 0.0, %v361
    %v363 = vpop.f32.mrf.mxu0
    %364 = vmatprep.mubr.f32.mxu0 0.0
    %365 = vmatmul.mubr.f32.gmra.mxu0 %v269
    %v366 = vpop.f32.mrf.mxu0
    %v367 = vadd.f32 0.0, %v366
    %v368 = vpop.f32.mrf.mxu0
    %369 = vmatprep.mubr.f32.mxu0 0.0
    %370 = vmatmul.mubr.f32.gmra.mxu0 %v272
    %v371 = vpop.f32.mrf.mxu0
    %v372 = vadd.f32 0.0, %v371
    %v373 = vpop.f32.mrf.mxu0
    %374 = vmatprep.mubr.f32.mxu0 0.0
    %375 = vmatmul.mubr.f32.gmra.mxu0 %v275
    %v376 = vpop.f32.mrf.mxu0
    %v377 = vadd.f32 0.0, %v376
    %v378 = vpop.f32.mrf.mxu0
    %379 = vmatprep.mubr.f32.mxu0 0.0
    %380 = vmatmul.mubr.f32.gmra.mxu0 %v278
    %v381 = vpop.f32.mrf.mxu0
    %v382 = vadd.f32 0.0, %v381
    %v383 = vpop.f32.mrf.mxu0
    %384 = vdwg.mxu0
    %v385 = vld [vmem:[#allocation8] sm:$0xff]
    %v386 = vld [vmem:[#allocation8 + $0x8] sm:$0xff]
    %v387 = vld [vmem:[#allocation8 + $0x10] sm:$0xff]
    %v388 = vld [vmem:[#allocation8 + $0x18] sm:$0xff]
    %v389 = vld [vmem:[#allocation8 + $0x20] sm:$0xff]
    %v390 = vld [vmem:[#allocation8 + $0x28] sm:$0xff]
    %v391 = vld [vmem:[#allocation8 + $0x30] sm:$0xff]
    %v392 = vld [vmem:[#allocation8 + $0x38] sm:$0xff]
    %v393 = vld [vmem:[%s5] sm:$0xff]
    %v395 = vsel %vm117, %v385, 0
    %v398 = vsel %vm117, %v386, 0
    %v401 = vsel %vm117, %v387, 0
    %v404 = vsel %vm117, %v388, 0
    %v407 = vsel %vm117, %v389, 0
    %v410 = vsel %vm117, %v390, 0
    %v413 = vsel %vm117, %v391, 0
    %v416 = vsel %vm117, %v392, 0
    %418 = vmatprep.subr.mxu0 0.0
    %419 = vmatpush1.msra.mxu0 0.0
    %420 = vmatprep.subr.mxu0 0.0
    %421 = vmatpush1.msra.mxu0 0.0
    %422 = vmatprep.subr.mxu0 0.0
    %423 = vmatpush1.msra.mxu0 0.0
    %424 = vmatprep.subr.mxu0 0.0
    %425 = vmatpush1.msra.mxu0 0.0
    %426 = vmatprep.subr.mxu0 0.0
    %427 = vmatpush1.msra.mxu0 0.0
    %428 = vmatprep.subr.mxu0 0.0
    %429 = vmatpush1.msra.mxu0 0.0
    %430 = vmatprep.subr.mxu0 0.0
    %431 = vmatpush1.msra.mxu0 0.0
    %432 = vmatprep.subr.mxu0 0.0
    %433 = vmatpush1.msra.mxu0 0.0
    %434 = vmatprep.subr.mxu0 0.0
    %435 = vmatpush1.msra.mxu0 0.0
    %436 = vmatprep.subr.mxu0 0.0
    %437 = vmatpush1.msra.mxu0 0.0
    %438 = vmatprep.subr.mxu0 0.0
    %439 = vmatpush1.msra.mxu0 0.0
    %440 = vmatprep.subr.mxu0 0.0
    %441 = vmatpush1.msra.mxu0 0.0
    %442 = vmatprep.subr.mxu0 0.0
    %443 = vmatpush1.msra.mxu0 0.0
    %444 = vmatprep.subr.mxu0 0.0
    %445 = vmatpush1.msra.mxu0 0.0
    %446 = vmatprep.subr.mxu0 0.0
    %447 = vmatpush1.msra.mxu0 0.0
    %448 = vmatprep.subr.mxu0 0.0
    %449 = vmatpush1.msra.mxu0 %v393
    %450 = vmatprep.subr.mxu0 0.0
    %451 = vmatpush2.msra.mxu0 0.0
    %452 = vmatprep.subr.mxu0 0.0
    %453 = vmatpush2.msra.mxu0 0.0
    %454 = vmatprep.subr.mxu0 0.0
    %455 = vmatpush2.msra.mxu0 0.0
    %456 = vmatprep.subr.mxu0 0.0
    %457 = vmatpush2.msra.mxu0 0.0
    %458 = vmatprep.subr.mxu0 0.0
    %459 = vmatpush2.msra.mxu0 0.0
    %460 = vmatprep.subr.mxu0 0.0
    %461 = vmatpush2.msra.mxu0 0.0
    %462 = vmatprep.subr.mxu0 0.0
    %463 = vmatpush2.msra.mxu0 0.0
    %464 = vmatprep.subr.mxu0 0.0
    %465 = vmatpush2.msra.mxu0 0.0
    %466 = vmatprep.subr.mxu0 0.0
    %467 = vmatpush2.msra.mxu0 0.0
    %468 = vmatprep.subr.mxu0 0.0
    %469 = vmatpush2.msra.mxu0 0.0
    %470 = vmatprep.subr.mxu0 0.0
    %471 = vmatpush2.msra.mxu0 0.0
    %472 = vmatprep.subr.mxu0 0.0
    %473 = vmatpush2.msra.mxu0 0.0
    %474 = vmatprep.subr.mxu0 0.0
    %475 = vmatpush2.msra.mxu0 0.0
    %476 = vmatprep.subr.mxu0 0.0
    %477 = vmatpush2.msra.mxu0 0.0
    %478 = vmatprep.subr.mxu0 0.0
    %479 = vmatpush2.msra.mxu0 0.0
    %480 = vmatprep.subr.mxu0 0.0
    %481 = vmatpush2.msra.mxu0 0.0
    %482 = vmatprep.mubr.f32.mxu0 0.0
    %483 = vmatmul.mubr.f32.gmra.mxu0 %v395
    %v484 = vpop.f32.mrf.mxu0
    %v485 = vadd.f32 0.0, %v484
    %v486 = vpop.f32.mrf.mxu0
    %487 = vmatprep.mubr.f32.mxu0 0.0
    %488 = vmatmul.mubr.f32.gmra.mxu0 %v398
    %v489 = vpop.f32.mrf.mxu0
    %v490 = vadd.f32 0.0, %v489
    %v491 = vpop.f32.mrf.mxu0
    %492 = vmatprep.mubr.f32.mxu0 0.0
    %493 = vmatmul.mubr.f32.gmra.mxu0 %v401
    %v494 = vpop.f32.mrf.mxu0
    %v495 = vadd.f32 0.0, %v494
    %v496 = vpop.f32.mrf.mxu0
    %497 = vmatprep.mubr.f32.mxu0 0.0
    %498 = vmatmul.mubr.f32.gmra.mxu0 %v404
    %v499 = vpop.f32.mrf.mxu0
    %v500 = vadd.f32 0.0, %v499
    %v501 = vpop.f32.mrf.mxu0
    %502 = vmatprep.mubr.f32.mxu0 0.0
    %503 = vmatmul.mubr.f32.gmra.mxu0 %v407
    %v504 = vpop.f32.mrf.mxu0
    %v505 = vadd.f32 0.0, %v504
    %v506 = vpop.f32.mrf.mxu0
    %507 = vmatprep.mubr.f32.mxu0 0.0
    %508 = vmatmul.mubr.f32.gmra.mxu0 %v410
    %v509 = vpop.f32.mrf.mxu0
    %v510 = vadd.f32 0.0, %v509
    %v511 = vpop.f32.mrf.mxu0
    %512 = vmatprep.mubr.f32.mxu0 0.0
    %513 = vmatmul.mubr.f32.gmra.mxu0 %v413
    %v514 = vpop.f32.mrf.mxu0
    %v515 = vadd.f32 0.0, %v514
    %v516 = vpop.f32.mrf.mxu0
    %517 = vmatprep.mubr.f32.mxu0 0.0
    %518 = vmatmul.mubr.f32.gmra.mxu0 %v416
    %v519 = vpop.f32.mrf.mxu0
    %v520 = vadd.f32 0.0, %v519
    %v521 = vpop.f32.mrf.mxu0
    %522 = vdwg.mxu0
    %v523 = vmul.f32 %v485, 0.17677669
    %v524 = vmul.f32 %v490, 0.17677669
    %v525 = vmul.f32 %v495, 0.17677669
    %v526 = vmul.f32 %v500, 0.17677669
    %v527 = vmul.f32 %v505, 0.17677669
    %v528 = vmul.f32 %v510, 0.17677669
    %v529 = vmul.f32 %v515, 0.17677669
    %v530 = vmul.f32 %v520, 0.17677669
    %v532 = vsel %vm117, %v523, 0
    %v535 = vsel %vm117, %v347, 0
    %537 = vmatprep.subr.mxu0 0.0
    %538 = vmatpush1.xpose.msra.mxu0 0.0
    %539 = vmatprep.subr.mxu0 0.0
    %540 = vmatpush1.xpose.msra.mxu0 0.0
    %541 = vmatprep.subr.mxu0 0.0
    %542 = vmatpush1.xpose.msra.mxu0 0.0
    %543 = vmatprep.subr.mxu0 0.0
    %544 = vmatpush1.xpose.msra.mxu0 0.0
    %545 = vmatprep.subr.mxu0 0.0
    %546 = vmatpush1.xpose.msra.mxu0 0.0
    %547 = vmatprep.subr.mxu0 0.0
    %548 = vmatpush1.xpose.msra.mxu0 0.0
    %549 = vmatprep.subr.mxu0 0.0
    %550 = vmatpush1.xpose.msra.mxu0 0.0
    %551 = vmatprep.subr.mxu0 0.0
    %552 = vmatpush1.xpose.msra.mxu0 0.0
    %553 = vmatprep.subr.mxu0 0.0
    %554 = vmatpush1.xpose.msra.mxu0 0.0
    %555 = vmatprep.subr.mxu0 0.0
    %556 = vmatpush1.xpose.msra.mxu0 0.0
    %557 = vmatprep.subr.mxu0 0.0
    %558 = vmatpush1.xpose.msra.mxu0 0.0
    %559 = vmatprep.subr.mxu0 0.0
    %560 = vmatpush1.xpose.msra.mxu0 0.0
    %561 = vmatprep.subr.mxu0 0.0
    %562 = vmatpush1.xpose.msra.mxu0 0.0
    %563 = vmatprep.subr.mxu0 0.0
    %564 = vmatpush1.xpose.msra.mxu0 0.0
    %565 = vmatprep.subr.mxu0 0.0
    %566 = vmatpush1.xpose.msra.mxu0 0.0
    %567 = vmatprep.subr.mxu0 0.0
    %568 = vmatpush1.xpose.msra.mxu0 %v535
    %569 = vmatprep.subr.mxu0 0.0
    %570 = vmatpush2.xpose.msra.mxu0 0.0
    %571 = vmatprep.subr.mxu0 0.0
    %572 = vmatpush2.xpose.msra.mxu0 0.0
    %573 = vmatprep.subr.mxu0 0.0
    %574 = vmatpush2.xpose.msra.mxu0 0.0
    %575 = vmatprep.subr.mxu0 0.0
    %576 = vmatpush2.xpose.msra.mxu0 0.0
    %577 = vmatprep.subr.mxu0 0.0
    %578 = vmatpush2.xpose.msra.mxu0 0.0
    %579 = vmatprep.subr.mxu0 0.0
    %580 = vmatpush2.xpose.msra.mxu0 0.0
    %581 = vmatprep.subr.mxu0 0.0
    %582 = vmatpush2.xpose.msra.mxu0 0.0
    %583 = vmatprep.subr.mxu0 0.0
    %584 = vmatpush2.xpose.msra.mxu0 0.0
    %585 = vmatprep.subr.mxu0 0.0
    %586 = vmatpush2.xpose.msra.mxu0 0.0
    %587 = vmatprep.subr.mxu0 0.0
    %588 = vmatpush2.xpose.msra.mxu0 0.0
    %589 = vmatprep.subr.mxu0 0.0
    %590 = vmatpush2.xpose.msra.mxu0 0.0
    %591 = vmatprep.subr.mxu0 0.0
    %592 = vmatpush2.xpose.msra.mxu0 0.0
    %593 = vmatprep.subr.mxu0 0.0
    %594 = vmatpush2.xpose.msra.mxu0 0.0
    %595 = vmatprep.subr.mxu0 0.0
    %596 = vmatpush2.xpose.msra.mxu0 0.0
    %597 = vmatprep.subr.mxu0 0.0
    %598 = vmatpush2.xpose.msra.mxu0 0.0
    %599 = vmatprep.subr.mxu0 0.0
    %600 = vmatpush2.xpose.msra.mxu0 0.0
    %601 = vmatprep.mubr.f32.mxu0 0.0
    %602 = vmatmul.mubr.f32.gmra.mxu0 %v532
    %v603 = vpop.f32.mrf.mxu0
    %v604 = vadd.f32 0.0, %v603
    %v605 = vpop.f32.mrf.mxu0
    %606 = vdwg.mxu0
    %v608 = vsel %vm117, %v524, 0
    %v611 = vsel %vm117, %v352, 0
    %613 = vmatprep.subr.mxu0 0.0
    %614 = vmatpush1.xpose.msra.mxu0 0.0
    %615 = vmatprep.subr.mxu0 0.0
    %616 = vmatpush1.xpose.msra.mxu0 0.0
    %617 = vmatprep.subr.mxu0 0.0
    %618 = vmatpush1.xpose.msra.mxu0 0.0
    %619 = vmatprep.subr.mxu0 0.0
    %620 = vmatpush1.xpose.msra.mxu0 0.0
    %621 = vmatprep.subr.mxu0 0.0
    %622 = vmatpush1.xpose.msra.mxu0 0.0
    %623 = vmatprep.subr.mxu0 0.0
    %624 = vmatpush1.xpose.msra.mxu0 0.0
    %625 = vmatprep.subr.mxu0 0.0
    %626 = vmatpush1.xpose.msra.mxu0 0.0
    %627 = vmatprep.subr.mxu0 0.0
    %628 = vmatpush1.xpose.msra.mxu0 0.0
    %629 = vmatprep.subr.mxu0 0.0
    %630 = vmatpush1.xpose.msra.mxu0 0.0
    %631 = vmatprep.subr.mxu0 0.0
    %632 = vmatpush1.xpose.msra.mxu0 0.0
    %633 = vmatprep.subr.mxu0 0.0
    %634 = vmatpush1.xpose.msra.mxu0 0.0
    %635 = vmatprep.subr.mxu0 0.0
    %636 = vmatpush1.xpose.msra.mxu0 0.0
    %637 = vmatprep.subr.mxu0 0.0
    %638 = vmatpush1.xpose.msra.mxu0 0.0
    %639 = vmatprep.subr.mxu0 0.0
    %640 = vmatpush1.xpose.msra.mxu0 0.0
    %641 = vmatprep.subr.mxu0 0.0
    %642 = vmatpush1.xpose.msra.mxu0 0.0
    %643 = vmatprep.subr.mxu0 0.0
    %644 = vmatpush1.xpose.msra.mxu0 %v611
    %645 = vmatprep.subr.mxu0 0.0
    %646 = vmatpush2.xpose.msra.mxu0 0.0
    %647 = vmatprep.subr.mxu0 0.0
    %648 = vmatpush2.xpose.msra.mxu0 0.0
    %649 = vmatprep.subr.mxu0 0.0
    %650 = vmatpush2.xpose.msra.mxu0 0.0
    %651 = vmatprep.subr.mxu0 0.0
    %652 = vmatpush2.xpose.msra.mxu0 0.0
    %653 = vmatprep.subr.mxu0 0.0
    %654 = vmatpush2.xpose.msra.mxu0 0.0
    %655 = vmatprep.subr.mxu0 0.0
    %656 = vmatpush2.xpose.msra.mxu0 0.0
    %657 = vmatprep.subr.mxu0 0.0
    %658 = vmatpush2.xpose.msra.mxu0 0.0
    %659 = vmatprep.subr.mxu0 0.0
    %660 = vmatpush2.xpose.msra.mxu0 0.0
    %661 = vmatprep.subr.mxu0 0.0
    %662 = vmatpush2.xpose.msra.mxu0 0.0
    %663 = vmatprep.subr.mxu0 0.0
    %664 = vmatpush2.xpose.msra.mxu0 0.0
    %665 = vmatprep.subr.mxu0 0.0
    %666 = vmatpush2.xpose.msra.mxu0 0.0
    %667 = vmatprep.subr.mxu0 0.0
    %668 = vmatpush2.xpose.msra.mxu0 0.0
    %669 = vmatprep.subr.mxu0 0.0
    %670 = vmatpush2.xpose.msra.mxu0 0.0
    %671 = vmatprep.subr.mxu0 0.0
    %672 = vmatpush2.xpose.msra.mxu0 0.0
    %673 = vmatprep.subr.mxu0 0.0
    %674 = vmatpush2.xpose.msra.mxu0 0.0
    %675 = vmatprep.subr.mxu0 0.0
    %676 = vmatpush2.xpose.msra.mxu0 0.0
    %677 = vmatprep.mubr.f32.mxu0 0.0
    %678 = vmatmul.mubr.f32.gmra.mxu0 %v608
    %v679 = vpop.f32.mrf.mxu0
    %v680 = vadd.f32 0.0, %v679
    %v681 = vpop.f32.mrf.mxu0
    %682 = vdwg.mxu0
    %v684 = vsel %vm117, %v525, 0
    %v687 = vsel %vm117, %v357, 0
    %689 = vmatprep.subr.mxu0 0.0
    %690 = vmatpush1.xpose.msra.mxu0 0.0
    %691 = vmatprep.subr.mxu0 0.0
    %692 = vmatpush1.xpose.msra.mxu0 0.0
    %693 = vmatprep.subr.mxu0 0.0
    %694 = vmatpush1.xpose.msra.mxu0 0.0
    %695 = vmatprep.subr.mxu0 0.0
    %696 = vmatpush1.xpose.msra.mxu0 0.0
    %697 = vmatprep.subr.mxu0 0.0
    %698 = vmatpush1.xpose.msra.mxu0 0.0
    %699 = vmatprep.subr.mxu0 0.0
    %700 = vmatpush1.xpose.msra.mxu0 0.0
    %701 = vmatprep.subr.mxu0 0.0
    %702 = vmatpush1.xpose.msra.mxu0 0.0
    %703 = vmatprep.subr.mxu0 0.0
    %704 = vmatpush1.xpose.msra.mxu0 0.0
    %705 = vmatprep.subr.mxu0 0.0
    %706 = vmatpush1.xpose.msra.mxu0 0.0
    %707 = vmatprep.subr.mxu0 0.0
    %708 = vmatpush1.xpose.msra.mxu0 0.0
    %709 = vmatprep.subr.mxu0 0.0
    %710 = vmatpush1.xpose.msra.mxu0 0.0
    %711 = vmatprep.subr.mxu0 0.0
    %712 = vmatpush1.xpose.msra.mxu0 0.0
    %713 = vmatprep.subr.mxu0 0.0
    %714 = vmatpush1.xpose.msra.mxu0 0.0
    %715 = vmatprep.subr.mxu0 0.0
    %716 = vmatpush1.xpose.msra.mxu0 0.0
    %717 = vmatprep.subr.mxu0 0.0
    %718 = vmatpush1.xpose.msra.mxu0 0.0
    %719 = vmatprep.subr.mxu0 0.0
    %720 = vmatpush1.xpose.msra.mxu0 %v687
    %721 = vmatprep.subr.mxu0 0.0
    %722 = vmatpush2.xpose.msra.mxu0 0.0
    %723 = vmatprep.subr.mxu0 0.0
    %724 = vmatpush2.xpose.msra.mxu0 0.0
    %725 = vmatprep.subr.mxu0 0.0
    %726 = vmatpush2.xpose.msra.mxu0 0.0
    %727 = vmatprep.subr.mxu0 0.0
    %728 = vmatpush2.xpose.msra.mxu0 0.0
    %729 = vmatprep.subr.mxu0 0.0
    %730 = vmatpush2.xpose.msra.mxu0 0.0
    %731 = vmatprep.subr.mxu0 0.0
    %732 = vmatpush2.xpose.msra.mxu0 0.0
    %733 = vmatprep.subr.mxu0 0.0
    %734 = vmatpush2.xpose.msra.mxu0 0.0
    %735 = vmatprep.subr.mxu0 0.0
    %736 = vmatpush2.xpose.msra.mxu0 0.0
    %737 = vmatprep.subr.mxu0 0.0
    %738 = vmatpush2.xpose.msra.mxu0 0.0
    %739 = vmatprep.subr.mxu0 0.0
    %740 = vmatpush2.xpose.msra.mxu0 0.0
    %741 = vmatprep.subr.mxu0 0.0
    %742 = vmatpush2.xpose.msra.mxu0 0.0
    %743 = vmatprep.subr.mxu0 0.0
    %744 = vmatpush2.xpose.msra.mxu0 0.0
    %745 = vmatprep.subr.mxu0 0.0
    %746 = vmatpush2.xpose.msra.mxu0 0.0
    %747 = vmatprep.subr.mxu0 0.0
    %748 = vmatpush2.xpose.msra.mxu0 0.0
    %749 = vmatprep.subr.mxu0 0.0
    %750 = vmatpush2.xpose.msra.mxu0 0.0
    %751 = vmatprep.subr.mxu0 0.0
    %752 = vmatpush2.xpose.msra.mxu0 0.0
    %753 = vmatprep.mubr.f32.mxu0 0.0
    %754 = vmatmul.mubr.f32.gmra.mxu0 %v684
    %v755 = vpop.f32.mrf.mxu0
    %v756 = vadd.f32 0.0, %v755
    %v757 = vpop.f32.mrf.mxu0
    %758 = vdwg.mxu0
    %v760 = vsel %vm117, %v526, 0
    %v763 = vsel %vm117, %v362, 0
    %765 = vmatprep.subr.mxu0 0.0
    %766 = vmatpush1.xpose.msra.mxu0 0.0
    %767 = vmatprep.subr.mxu0 0.0
    %768 = vmatpush1.xpose.msra.mxu0 0.0
    %769 = vmatprep.subr.mxu0 0.0
    %770 = vmatpush1.xpose.msra.mxu0 0.0
    %771 = vmatprep.subr.mxu0 0.0
    %772 = vmatpush1.xpose.msra.mxu0 0.0
    %773 = vmatprep.subr.mxu0 0.0
    %774 = vmatpush1.xpose.msra.mxu0 0.0
    %775 = vmatprep.subr.mxu0 0.0
    %776 = vmatpush1.xpose.msra.mxu0 0.0
    %777 = vmatprep.subr.mxu0 0.0
    %778 = vmatpush1.xpose.msra.mxu0 0.0
    %779 = vmatprep.subr.mxu0 0.0
    %780 = vmatpush1.xpose.msra.mxu0 0.0
    %781 = vmatprep.subr.mxu0 0.0
    %782 = vmatpush1.xpose.msra.mxu0 0.0
    %783 = vmatprep.subr.mxu0 0.0
    %784 = vmatpush1.xpose.msra.mxu0 0.0
    %785 = vmatprep.subr.mxu0 0.0
    %786 = vmatpush1.xpose.msra.mxu0 0.0
    %787 = vmatprep.subr.mxu0 0.0
    %788 = vmatpush1.xpose.msra.mxu0 0.0
    %789 = vmatprep.subr.mxu0 0.0
    %790 = vmatpush1.xpose.msra.mxu0 0.0
    %791 = vmatprep.subr.mxu0 0.0
    %792 = vmatpush1.xpose.msra.mxu0 0.0
    %793 = vmatprep.subr.mxu0 0.0
    %794 = vmatpush1.xpose.msra.mxu0 0.0
    %795 = vmatprep.subr.mxu0 0.0
    %796 = vmatpush1.xpose.msra.mxu0 %v763
    %797 = vmatprep.subr.mxu0 0.0
    %798 = vmatpush2.xpose.msra.mxu0 0.0
    %799 = vmatprep.subr.mxu0 0.0
    %800 = vmatpush2.xpose.msra.mxu0 0.0
    %801 = vmatprep.subr.mxu0 0.0
    %802 = vmatpush2.xpose.msra.mxu0 0.0
    %803 = vmatprep.subr.mxu0 0.0
    %804 = vmatpush2.xpose.msra.mxu0 0.0
    %805 = vmatprep.subr.mxu0 0.0
    %806 = vmatpush2.xpose.msra.mxu0 0.0
    %807 = vmatprep.subr.mxu0 0.0
    %808 = vmatpush2.xpose.msra.mxu0 0.0
    %809 = vmatprep.subr.mxu0 0.0
    %810 = vmatpush2.xpose.msra.mxu0 0.0
    %811 = vmatprep.subr.mxu0 0.0
    %812 = vmatpush2.xpose.msra.mxu0 0.0
    %813 = vmatprep.subr.mxu0 0.0
    %814 = vmatpush2.xpose.msra.mxu0 0.0
    %815 = vmatprep.subr.mxu0 0.0
    %816 = vmatpush2.xpose.msra.mxu0 0.0
    %817 = vmatprep.subr.mxu0 0.0
    %818 = vmatpush2.xpose.msra.mxu0 0.0
    %819 = vmatprep.subr.mxu0 0.0
    %820 = vmatpush2.xpose.msra.mxu0 0.0
    %821 = vmatprep.subr.mxu0 0.0
    %822 = vmatpush2.xpose.msra.mxu0 0.0
    %823 = vmatprep.subr.mxu0 0.0
    %824 = vmatpush2.xpose.msra.mxu0 0.0
    %825 = vmatprep.subr.mxu0 0.0
    %826 = vmatpush2.xpose.msra.mxu0 0.0
    %827 = vmatprep.subr.mxu0 0.0
    %828 = vmatpush2.xpose.msra.mxu0 0.0
    %829 = vmatprep.mubr.f32.mxu0 0.0
    %830 = vmatmul.mubr.f32.gmra.mxu0 %v760
    %v831 = vpop.f32.mrf.mxu0
    %v832 = vadd.f32 0.0, %v831
    %v833 = vpop.f32.mrf.mxu0
    %834 = vdwg.mxu0
    %v836 = vsel %vm117, %v527, 0
    %v839 = vsel %vm117, %v367, 0
    %841 = vmatprep.subr.mxu0 0.0
    %842 = vmatpush1.xpose.msra.mxu0 0.0
    %843 = vmatprep.subr.mxu0 0.0
    %844 = vmatpush1.xpose.msra.mxu0 0.0
    %845 = vmatprep.subr.mxu0 0.0
    %846 = vmatpush1.xpose.msra.mxu0 0.0
    %847 = vmatprep.subr.mxu0 0.0
    %848 = vmatpush1.xpose.msra.mxu0 0.0
    %849 = vmatprep.subr.mxu0 0.0
    %850 = vmatpush1.xpose.msra.mxu0 0.0
    %851 = vmatprep.subr.mxu0 0.0
    %852 = vmatpush1.xpose.msra.mxu0 0.0
    %853 = vmatprep.subr.mxu0 0.0
    %854 = vmatpush1.xpose.msra.mxu0 0.0
    %855 = vmatprep.subr.mxu0 0.0
    %856 = vmatpush1.xpose.msra.mxu0 0.0
    %857 = vmatprep.subr.mxu0 0.0
    %858 = vmatpush1.xpose.msra.mxu0 0.0
    %859 = vmatprep.subr.mxu0 0.0
    %860 = vmatpush1.xpose.msra.mxu0 0.0
    %861 = vmatprep.subr.mxu0 0.0
    %862 = vmatpush1.xpose.msra.mxu0 0.0
    %863 = vmatprep.subr.mxu0 0.0
    %864 = vmatpush1.xpose.msra.mxu0 0.0
    %865 = vmatprep.subr.mxu0 0.0
    %866 = vmatpush1.xpose.msra.mxu0 0.0
    %867 = vmatprep.subr.mxu0 0.0
    %868 = vmatpush1.xpose.msra.mxu0 0.0
    %869 = vmatprep.subr.mxu0 0.0
    %870 = vmatpush1.xpose.msra.mxu0 0.0
    %871 = vmatprep.subr.mxu0 0.0
    %872 = vmatpush1.xpose.msra.mxu0 %v839
    %873 = vmatprep.subr.mxu0 0.0
    %874 = vmatpush2.xpose.msra.mxu0 0.0
    %875 = vmatprep.subr.mxu0 0.0
    %876 = vmatpush2.xpose.msra.mxu0 0.0
    %877 = vmatprep.subr.mxu0 0.0
    %878 = vmatpush2.xpose.msra.mxu0 0.0
    %879 = vmatprep.subr.mxu0 0.0
    %880 = vmatpush2.xpose.msra.mxu0 0.0
    %881 = vmatprep.subr.mxu0 0.0
    %882 = vmatpush2.xpose.msra.mxu0 0.0
    %883 = vmatprep.subr.mxu0 0.0
    %884 = vmatpush2.xpose.msra.mxu0 0.0
    %885 = vmatprep.subr.mxu0 0.0
    %886 = vmatpush2.xpose.msra.mxu0 0.0
    %887 = vmatprep.subr.mxu0 0.0
    %888 = vmatpush2.xpose.msra.mxu0 0.0
    %889 = vmatprep.subr.mxu0 0.0
    %890 = vmatpush2.xpose.msra.mxu0 0.0
    %891 = vmatprep.subr.mxu0 0.0
    %892 = vmatpush2.xpose.msra.mxu0 0.0
    %893 = vmatprep.subr.mxu0 0.0
    %894 = vmatpush2.xpose.msra.mxu0 0.0
    %895 = vmatprep.subr.mxu0 0.0
    %896 = vmatpush2.xpose.msra.mxu0 0.0
    %897 = vmatprep.subr.mxu0 0.0
    %898 = vmatpush2.xpose.msra.mxu0 0.0
    %899 = vmatprep.subr.mxu0 0.0
    %900 = vmatpush2.xpose.msra.mxu0 0.0
    %901 = vmatprep.subr.mxu0 0.0
    %902 = vmatpush2.xpose.msra.mxu0 0.0
    %903 = vmatprep.subr.mxu0 0.0
    %904 = vmatpush2.xpose.msra.mxu0 0.0
    %905 = vmatprep.mubr.f32.mxu0 0.0
    %906 = vmatmul.mubr.f32.gmra.mxu0 %v836
    %v907 = vpop.f32.mrf.mxu0
    %v908 = vadd.f32 0.0, %v907
    %v909 = vpop.f32.mrf.mxu0
    %910 = vdwg.mxu0
    %v912 = vsel %vm117, %v528, 0
    %v915 = vsel %vm117, %v372, 0
    %917 = vmatprep.subr.mxu0 0.0
    %918 = vmatpush1.xpose.msra.mxu0 0.0
    %919 = vmatprep.subr.mxu0 0.0
    %920 = vmatpush1.xpose.msra.mxu0 0.0
    %921 = vmatprep.subr.mxu0 0.0
    %922 = vmatpush1.xpose.msra.mxu0 0.0
    %923 = vmatprep.subr.mxu0 0.0
    %924 = vmatpush1.xpose.msra.mxu0 0.0
    %925 = vmatprep.subr.mxu0 0.0
    %926 = vmatpush1.xpose.msra.mxu0 0.0
    %927 = vmatprep.subr.mxu0 0.0
    %928 = vmatpush1.xpose.msra.mxu0 0.0
    %929 = vmatprep.subr.mxu0 0.0
    %930 = vmatpush1.xpose.msra.mxu0 0.0
    %931 = vmatprep.subr.mxu0 0.0
    %932 = vmatpush1.xpose.msra.mxu0 0.0
    %933 = vmatprep.subr.mxu0 0.0
    %934 = vmatpush1.xpose.msra.mxu0 0.0
    %935 = vmatprep.subr.mxu0 0.0
    %936 = vmatpush1.xpose.msra.mxu0 0.0
    %937 = vmatprep.subr.mxu0 0.0
    %938 = vmatpush1.xpose.msra.mxu0 0.0
    %939 = vmatprep.subr.mxu0 0.0
    %940 = vmatpush1.xpose.msra.mxu0 0.0
    %941 = vmatprep.subr.mxu0 0.0
    %942 = vmatpush1.xpose.msra.mxu0 0.0
    %943 = vmatprep.subr.mxu0 0.0
    %944 = vmatpush1.xpose.msra.mxu0 0.0
    %945 = vmatprep.subr.mxu0 0.0
    %946 = vmatpush1.xpose.msra.mxu0 0.0
    %947 = vmatprep.subr.mxu0 0.0
    %948 = vmatpush1.xpose.msra.mxu0 %v915
    %949 = vmatprep.subr.mxu0 0.0
    %950 = vmatpush2.xpose.msra.mxu0 0.0
    %951 = vmatprep.subr.mxu0 0.0
    %952 = vmatpush2.xpose.msra.mxu0 0.0
    %953 = vmatprep.subr.mxu0 0.0
    %954 = vmatpush2.xpose.msra.mxu0 0.0
    %955 = vmatprep.subr.mxu0 0.0
    %956 = vmatpush2.xpose.msra.mxu0 0.0
    %957 = vmatprep.subr.mxu0 0.0
    %958 = vmatpush2.xpose.msra.mxu0 0.0
    %959 = vmatprep.subr.mxu0 0.0
    %960 = vmatpush2.xpose.msra.mxu0 0.0
    %961 = vmatprep.subr.mxu0 0.0
    %962 = vmatpush2.xpose.msra.mxu0 0.0
    %963 = vmatprep.subr.mxu0 0.0
    %964 = vmatpush2.xpose.msra.mxu0 0.0
    %965 = vmatprep.subr.mxu0 0.0
    %966 = vmatpush2.xpose.msra.mxu0 0.0
    %967 = vmatprep.subr.mxu0 0.0
    %968 = vmatpush2.xpose.msra.mxu0 0.0
    %969 = vmatprep.subr.mxu0 0.0
    %970 = vmatpush2.xpose.msra.mxu0 0.0
    %971 = vmatprep.subr.mxu0 0.0
    %972 = vmatpush2.xpose.msra.mxu0 0.0
    %973 = vmatprep.subr.mxu0 0.0
    %974 = vmatpush2.xpose.msra.mxu0 0.0
    %975 = vmatprep.subr.mxu0 0.0
    %976 = vmatpush2.xpose.msra.mxu0 0.0
    %977 = vmatprep.subr.mxu0 0.0
    %978 = vmatpush2.xpose.msra.mxu0 0.0
    %979 = vmatprep.subr.mxu0 0.0
    %980 = vmatpush2.xpose.msra.mxu0 0.0
    %981 = vmatprep.mubr.f32.mxu0 0.0
    %982 = vmatmul.mubr.f32.gmra.mxu0 %v912
    %v983 = vpop.f32.mrf.mxu0
    %v984 = vadd.f32 0.0, %v983
    %v985 = vpop.f32.mrf.mxu0
    %986 = vdwg.mxu0
    %v988 = vsel %vm117, %v529, 0
    %v991 = vsel %vm117, %v377, 0
    %993 = vmatprep.subr.mxu0 0.0
    %994 = vmatpush1.xpose.msra.mxu0 0.0
    %995 = vmatprep.subr.mxu0 0.0
    %996 = vmatpush1.xpose.msra.mxu0 0.0
    %997 = vmatprep.subr.mxu0 0.0
    %998 = vmatpush1.xpose.msra.mxu0 0.0
    %999 = vmatprep.subr.mxu0 0.0
    %1000 = vmatpush1.xpose.msra.mxu0 0.0
    %1001 = vmatprep.subr.mxu0 0.0
    %1002 = vmatpush1.xpose.msra.mxu0 0.0
    %1003 = vmatprep.subr.mxu0 0.0
    %1004 = vmatpush1.xpose.msra.mxu0 0.0
    %1005 = vmatprep.subr.mxu0 0.0
    %1006 = vmatpush1.xpose.msra.mxu0 0.0
    %1007 = vmatprep.subr.mxu0 0.0
    %1008 = vmatpush1.xpose.msra.mxu0 0.0
    %1009 = vmatprep.subr.mxu0 0.0
    %1010 = vmatpush1.xpose.msra.mxu0 0.0
    %1011 = vmatprep.subr.mxu0 0.0
    %1012 = vmatpush1.xpose.msra.mxu0 0.0
    %1013 = vmatprep.subr.mxu0 0.0
    %1014 = vmatpush1.xpose.msra.mxu0 0.0
    %1015 = vmatprep.subr.mxu0 0.0
    %1016 = vmatpush1.xpose.msra.mxu0 0.0
    %1017 = vmatprep.subr.mxu0 0.0
    %1018 = vmatpush1.xpose.msra.mxu0 0.0
    %1019 = vmatprep.subr.mxu0 0.0
    %1020 = vmatpush1.xpose.msra.mxu0 0.0
    %1021 = vmatprep.subr.mxu0 0.0
    %1022 = vmatpush1.xpose.msra.mxu0 0.0
    %1023 = vmatprep.subr.mxu0 0.0
    %1024 = vmatpush1.xpose.msra.mxu0 %v991
    %1025 = vmatprep.subr.mxu0 0.0
    %1026 = vmatpush2.xpose.msra.mxu0 0.0
    %1027 = vmatprep.subr.mxu0 0.0
    %1028 = vmatpush2.xpose.msra.mxu0 0.0
    %1029 = vmatprep.subr.mxu0 0.0
    %1030 = vmatpush2.xpose.msra.mxu0 0.0
    %1031 = vmatprep.subr.mxu0 0.0
    %1032 = vmatpush2.xpose.msra.mxu0 0.0
    %1033 = vmatprep.subr.mxu0 0.0
    %1034 = vmatpush2.xpose.msra.mxu0 0.0
    %1035 = vmatprep.subr.mxu0 0.0
    %1036 = vmatpush2.xpose.msra.mxu0 0.0
    %1037 = vmatprep.subr.mxu0 0.0
    %1038 = vmatpush2.xpose.msra.mxu0 0.0
    %1039 = vmatprep.subr.mxu0 0.0
    %1040 = vmatpush2.xpose.msra.mxu0 0.0
    %1041 = vmatprep.subr.mxu0 0.0
    %1042 = vmatpush2.xpose.msra.mxu0 0.0
    %1043 = vmatprep.subr.mxu0 0.0
    %1044 = vmatpush2.xpose.msra.mxu0 0.0
    %1045 = vmatprep.subr.mxu0 0.0
    %1046 = vmatpush2.xpose.msra.mxu0 0.0
    %1047 = vmatprep.subr.mxu0 0.0
    %1048 = vmatpush2.xpose.msra.mxu0 0.0
    %1049 = vmatprep.subr.mxu0 0.0
    %1050 = vmatpush2.xpose.msra.mxu0 0.0
    %1051 = vmatprep.subr.mxu0 0.0
    %1052 = vmatpush2.xpose.msra.mxu0 0.0
    %1053 = vmatprep.subr.mxu0 0.0
    %1054 = vmatpush2.xpose.msra.mxu0 0.0
    %1055 = vmatprep.subr.mxu0 0.0
    %1056 = vmatpush2.xpose.msra.mxu0 0.0
    %1057 = vmatprep.mubr.f32.mxu0 0.0
    %1058 = vmatmul.mubr.f32.gmra.mxu0 %v988
    %v1059 = vpop.f32.mrf.mxu0
    %v1060 = vadd.f32 0.0, %v1059
    %v1061 = vpop.f32.mrf.mxu0
    %1062 = vdwg.mxu0
    %v1064 = vsel %vm117, %v530, 0
    %v1067 = vsel %vm117, %v382, 0
    %1069 = vmatprep.subr.mxu0 0.0
    %1070 = vmatpush1.xpose.msra.mxu0 0.0
    %1071 = vmatprep.subr.mxu0 0.0
    %1072 = vmatpush1.xpose.msra.mxu0 0.0
    %1073 = vmatprep.subr.mxu0 0.0
    %1074 = vmatpush1.xpose.msra.mxu0 0.0
    %1075 = vmatprep.subr.mxu0 0.0
    %1076 = vmatpush1.xpose.msra.mxu0 0.0
    %1077 = vmatprep.subr.mxu0 0.0
    %1078 = vmatpush1.xpose.msra.mxu0 0.0
    %1079 = vmatprep.subr.mxu0 0.0
    %1080 = vmatpush1.xpose.msra.mxu0 0.0
    %1081 = vmatprep.subr.mxu0 0.0
    %1082 = vmatpush1.xpose.msra.mxu0 0.0
    %1083 = vmatprep.subr.mxu0 0.0
    %1084 = vmatpush1.xpose.msra.mxu0 0.0
    %1085 = vmatprep.subr.mxu0 0.0
    %1086 = vmatpush1.xpose.msra.mxu0 0.0
    %1087 = vmatprep.subr.mxu0 0.0
    %1088 = vmatpush1.xpose.msra.mxu0 0.0
    %1089 = vmatprep.subr.mxu0 0.0
    %1090 = vmatpush1.xpose.msra.mxu0 0.0
    %1091 = vmatprep.subr.mxu0 0.0
    %1092 = vmatpush1.xpose.msra.mxu0 0.0
    %1093 = vmatprep.subr.mxu0 0.0
    %1094 = vmatpush1.xpose.msra.mxu0 0.0
    %1095 = vmatprep.subr.mxu0 0.0
    %1096 = vmatpush1.xpose.msra.mxu0 0.0
    %1097 = vmatprep.subr.mxu0 0.0
    %1098 = vmatpush1.xpose.msra.mxu0 0.0
    %1099 = vmatprep.subr.mxu0 0.0
    %1100 = vmatpush1.xpose.msra.mxu0 %v1067
    %1101 = vmatprep.subr.mxu0 0.0
    %1102 = vmatpush2.xpose.msra.mxu0 0.0
    %1103 = vmatprep.subr.mxu0 0.0
    %1104 = vmatpush2.xpose.msra.mxu0 0.0
    %1105 = vmatprep.subr.mxu0 0.0
    %1106 = vmatpush2.xpose.msra.mxu0 0.0
    %1107 = vmatprep.subr.mxu0 0.0
    %1108 = vmatpush2.xpose.msra.mxu0 0.0
    %1109 = vmatprep.subr.mxu0 0.0
    %1110 = vmatpush2.xpose.msra.mxu0 0.0
    %1111 = vmatprep.subr.mxu0 0.0
    %1112 = vmatpush2.xpose.msra.mxu0 0.0
    %1113 = vmatprep.subr.mxu0 0.0
    %1114 = vmatpush2.xpose.msra.mxu0 0.0
    %1115 = vmatprep.subr.mxu0 0.0
    %1116 = vmatpush2.xpose.msra.mxu0 0.0
    %1117 = vmatprep.subr.mxu0 0.0
    %1118 = vmatpush2.xpose.msra.mxu0 0.0
    %1119 = vmatprep.subr.mxu0 0.0
    %1120 = vmatpush2.xpose.msra.mxu0 0.0
    %1121 = vmatprep.subr.mxu0 0.0
    %1122 = vmatpush2.xpose.msra.mxu0 0.0
    %1123 = vmatprep.subr.mxu0 0.0
    %1124 = vmatpush2.xpose.msra.mxu0 0.0
    %1125 = vmatprep.subr.mxu0 0.0
    %1126 = vmatpush2.xpose.msra.mxu0 0.0
    %1127 = vmatprep.subr.mxu0 0.0
    %1128 = vmatpush2.xpose.msra.mxu0 0.0
    %1129 = vmatprep.subr.mxu0 0.0
    %1130 = vmatpush2.xpose.msra.mxu0 0.0
    %1131 = vmatprep.subr.mxu0 0.0
    %1132 = vmatpush2.xpose.msra.mxu0 0.0
    %1133 = vmatprep.mubr.f32.mxu0 0.0
    %1134 = vmatmul.mubr.f32.gmra.mxu0 %v1064
    %v1135 = vpop.f32.mrf.mxu0
    %v1136 = vadd.f32 0.0, %v1135
    %v1137 = vpop.f32.mrf.mxu0
    %1138 = vdwg.mxu0
    %v1139 = vsel %vm117, %v604, -inf
    %1140 = vmax.xlane.f32.xlu0 %v1139
    %v1141 = vpop.xlane.xlu0 %1140
    %v1142 = vsel %vm117, %v680, -inf
    %1143 = vmax.xlane.f32.xlu0 %v1142
    %v1144 = vpop.xlane.xlu0 %1143
    %v1145 = vsel %vm117, %v756, -inf
    %1146 = vmax.xlane.f32.xlu0 %v1145
    %v1147 = vpop.xlane.xlu0 %1146
    %v1148 = vsel %vm117, %v832, -inf
    %1149 = vmax.xlane.f32.xlu0 %v1148
    %v1150 = vpop.xlane.xlu0 %1149
    %v1151 = vsel %vm117, %v908, -inf
    %1152 = vmax.xlane.f32.xlu0 %v1151
    %v1153 = vpop.xlane.xlu0 %1152
    %v1154 = vsel %vm117, %v984, -inf
    %1155 = vmax.xlane.f32.xlu0 %v1154
    %v1156 = vpop.xlane.xlu0 %1155
    %v1157 = vsel %vm117, %v1060, -inf
    %1158 = vmax.xlane.f32.xlu0 %v1157
    %v1159 = vpop.xlane.xlu0 %1158
    %v1160 = vsel %vm117, %v1136, -inf
    %1161 = vmax.xlane.f32.xlu0 %v1160
    %v1162 = vpop.xlane.xlu0 %1161
    %v1163 = vsub.f32 %v604, %v1141
    %v1164 = vsub.f32 %v680, %v1144
    %v1165 = vsub.f32 %v756, %v1147
    %v1166 = vsub.f32 %v832, %v1150
    %v1167 = vsub.f32 %v908, %v1153
    %v1168 = vsub.f32 %v984, %v1156
    %v1169 = vsub.f32 %v1060, %v1159
    %v1170 = vsub.f32 %v1136, %v1162
    %v1171 = vmul.f32 %v1163, 1.442695
    %v1172 = vpow.pop %v1171
    %v1173 = vmul.f32 %v1164, 1.442695
    %v1174 = vpow.pop %v1173
    %v1175 = vmul.f32 %v1165, 1.442695
    %v1176 = vpow.pop %v1175
    %v1177 = vmul.f32 %v1166, 1.442695
    %v1178 = vpow.pop %v1177
    %v1179 = vmul.f32 %v1167, 1.442695
    %v1180 = vpow.pop %v1179
    %v1181 = vmul.f32 %v1168, 1.442695
    %v1182 = vpow.pop %v1181
    %v1183 = vmul.f32 %v1169, 1.442695
    %v1184 = vpow.pop %v1183
    %v1185 = vmul.f32 %v1170, 1.442695
    %v1186 = vpow.pop %v1185
    %v1187 = vsel %vm117, %v1172, 0.0
    %1188 = vadd.xlane.f32.xlu0 %v1187
    %v1189 = vpop.xlane.xlu0 %1188
    %v1190 = vsel %vm117, %v1174, 0.0
    %1191 = vadd.xlane.f32.xlu0 %v1190
    %v1192 = vpop.xlane.xlu0 %1191
    %v1193 = vsel %vm117, %v1176, 0.0
    %1194 = vadd.xlane.f32.xlu0 %v1193
    %v1195 = vpop.xlane.xlu0 %1194
    %v1196 = vsel %vm117, %v1178, 0.0
    %1197 = vadd.xlane.f32.xlu0 %v1196
    %v1198 = vpop.xlane.xlu0 %1197
    %v1199 = vsel %vm117, %v1180, 0.0
    %1200 = vadd.xlane.f32.xlu0 %v1199
    %v1201 = vpop.xlane.xlu0 %1200
    %v1202 = vsel %vm117, %v1182, 0.0
    %1203 = vadd.xlane.f32.xlu0 %v1202
    %v1204 = vpop.xlane.xlu0 %1203
    %v1205 = vsel %vm117, %v1184, 0.0
    %1206 = vadd.xlane.f32.xlu0 %v1205
    %v1207 = vpop.xlane.xlu0 %1206
    %v1208 = vsel %vm117, %v1186, 0.0
    %1209 = vadd.xlane.f32.xlu0 %v1208
    %v1210 = vpop.xlane.xlu0 %1209
    %v1211 = vrcp.pop %v1189
    %v1212 = vrcp.pop %v1192
    %v1213 = vrcp.pop %v1195
    %v1214 = vrcp.pop %v1198
    %v1215 = vrcp.pop %v1201
    %v1216 = vrcp.pop %v1204
    %v1217 = vrcp.pop %v1207
    %v1218 = vrcp.pop %v1210
    %v1219 = vmul.f32 %v1172, %v1211
    %v1220 = vmul.f32 %v1174, %v1212
    %v1221 = vmul.f32 %v1176, %v1213
    %v1222 = vmul.f32 %v1178, %v1214
    %v1223 = vmul.f32 %v1180, %v1215
    %v1224 = vmul.f32 %v1182, %v1216
    %v1225 = vmul.f32 %v1184, %v1217
    %v1226 = vmul.f32 %v1186, %v1218
    %v1228 = vsel %vm117, %v1219, 0
    %1230 = vmatprep.subr.mxu0 0.0
    %1231 = vmatpush1.msra.mxu0 0.0
    %1232 = vmatprep.subr.mxu0 0.0
    %1233 = vmatpush1.msra.mxu0 0.0
    %1234 = vmatprep.subr.mxu0 0.0
    %1235 = vmatpush1.msra.mxu0 0.0
    %1236 = vmatprep.subr.mxu0 0.0
    %1237 = vmatpush1.msra.mxu0 0.0
    %1238 = vmatprep.subr.mxu0 0.0
    %1239 = vmatpush1.msra.mxu0 0.0
    %1240 = vmatprep.subr.mxu0 0.0
    %1241 = vmatpush1.msra.mxu0 0.0
    %1242 = vmatprep.subr.mxu0 0.0
    %1243 = vmatpush1.msra.mxu0 0.0
    %1244 = vmatprep.subr.mxu0 0.0
    %1245 = vmatpush1.msra.mxu0 0.0
    %1246 = vmatprep.subr.mxu0 0.0
    %1247 = vmatpush1.msra.mxu0 0.0
    %1248 = vmatprep.subr.mxu0 0.0
    %1249 = vmatpush1.msra.mxu0 0.0
    %1250 = vmatprep.subr.mxu0 0.0
    %1251 = vmatpush1.msra.mxu0 0.0
    %1252 = vmatprep.subr.mxu0 0.0
    %1253 = vmatpush1.msra.mxu0 0.0
    %1254 = vmatprep.subr.mxu0 0.0
    %1255 = vmatpush1.msra.mxu0 0.0
    %1256 = vmatprep.subr.mxu0 0.0
    %1257 = vmatpush1.msra.mxu0 0.0
    %1258 = vmatprep.subr.mxu0 0.0
    %1259 = vmatpush1.msra.mxu0 0.0
    %1260 = vmatprep.subr.mxu0 0.0
    %1261 = vmatpush1.msra.mxu0 %v209
    %1262 = vmatprep.subr.mxu0 0.0
    %1263 = vmatpush2.msra.mxu0 0.0
    %1264 = vmatprep.subr.mxu0 0.0
    %1265 = vmatpush2.msra.mxu0 0.0
    %1266 = vmatprep.subr.mxu0 0.0
    %1267 = vmatpush2.msra.mxu0 0.0
    %1268 = vmatprep.subr.mxu0 0.0
    %1269 = vmatpush2.msra.mxu0 0.0
    %1270 = vmatprep.subr.mxu0 0.0
    %1271 = vmatpush2.msra.mxu0 0.0
    %1272 = vmatprep.subr.mxu0 0.0
    %1273 = vmatpush2.msra.mxu0 0.0
    %1274 = vmatprep.subr.mxu0 0.0
    %1275 = vmatpush2.msra.mxu0 0.0
    %1276 = vmatprep.subr.mxu0 0.0
    %1277 = vmatpush2.msra.mxu0 0.0
    %1278 = vmatprep.subr.mxu0 0.0
    %1279 = vmatpush2.msra.mxu0 0.0
    %1280 = vmatprep.subr.mxu0 0.0
    %1281 = vmatpush2.msra.mxu0 0.0
    %1282 = vmatprep.subr.mxu0 0.0
    %1283 = vmatpush2.msra.mxu0 0.0
    %1284 = vmatprep.subr.mxu0 0.0
    %1285 = vmatpush2.msra.mxu0 0.0
    %1286 = vmatprep.subr.mxu0 0.0
    %1287 = vmatpush2.msra.mxu0 0.0
    %1288 = vmatprep.subr.mxu0 0.0
    %1289 = vmatpush2.msra.mxu0 0.0
    %1290 = vmatprep.subr.mxu0 0.0
    %1291 = vmatpush2.msra.mxu0 0.0
    %1292 = vmatprep.subr.mxu0 0.0
    %1293 = vmatpush2.msra.mxu0 0.0
    %1294 = vmatprep.mubr.f32.mxu0 0.0
    %1295 = vmatmul.mubr.f32.gmra.mxu0 %v1228
    %v1296 = vpop.f32.mrf.mxu0
    %v1297 = vadd.f32 0.0, %v1296
    %v1298 = vpop.f32.mrf.mxu0
    %1299 = vdwg.mxu0
    %v1301 = vsel %vm117, %v1220, 0
    %1303 = vmatprep.subr.mxu0 0.0
    %1304 = vmatpush1.msra.mxu0 0.0
    %1305 = vmatprep.subr.mxu0 0.0
    %1306 = vmatpush1.msra.mxu0 0.0
    %1307 = vmatprep.subr.mxu0 0.0
    %1308 = vmatpush1.msra.mxu0 0.0
    %1309 = vmatprep.subr.mxu0 0.0
    %1310 = vmatpush1.msra.mxu0 0.0
    %1311 = vmatprep.subr.mxu0 0.0
    %1312 = vmatpush1.msra.mxu0 0.0
    %1313 = vmatprep.subr.mxu0 0.0
    %1314 = vmatpush1.msra.mxu0 0.0
    %1315 = vmatprep.subr.mxu0 0.0
    %1316 = vmatpush1.msra.mxu0 0.0
    %1317 = vmatprep.subr.mxu0 0.0
    %1318 = vmatpush1.msra.mxu0 0.0
    %1319 = vmatprep.subr.mxu0 0.0
    %1320 = vmatpush1.msra.mxu0 0.0
    %1321 = vmatprep.subr.mxu0 0.0
    %1322 = vmatpush1.msra.mxu0 0.0
    %1323 = vmatprep.subr.mxu0 0.0
    %1324 = vmatpush1.msra.mxu0 0.0
    %1325 = vmatprep.subr.mxu0 0.0
    %1326 = vmatpush1.msra.mxu0 0.0
    %1327 = vmatprep.subr.mxu0 0.0
    %1328 = vmatpush1.msra.mxu0 0.0
    %1329 = vmatprep.subr.mxu0 0.0
    %1330 = vmatpush1.msra.mxu0 0.0
    %1331 = vmatprep.subr.mxu0 0.0
    %1332 = vmatpush1.msra.mxu0 0.0
    %1333 = vmatprep.subr.mxu0 0.0
    %1334 = vmatpush1.msra.mxu0 %v214
    %1335 = vmatprep.subr.mxu0 0.0
    %1336 = vmatpush2.msra.mxu0 0.0
    %1337 = vmatprep.subr.mxu0 0.0
    %1338 = vmatpush2.msra.mxu0 0.0
    %1339 = vmatprep.subr.mxu0 0.0
    %1340 = vmatpush2.msra.mxu0 0.0
    %1341 = vmatprep.subr.mxu0 0.0
    %1342 = vmatpush2.msra.mxu0 0.0
    %1343 = vmatprep.subr.mxu0 0.0
    %1344 = vmatpush2.msra.mxu0 0.0
    %1345 = vmatprep.subr.mxu0 0.0
    %1346 = vmatpush2.msra.mxu0 0.0
    %1347 = vmatprep.subr.mxu0 0.0
    %1348 = vmatpush2.msra.mxu0 0.0
    %1349 = vmatprep.subr.mxu0 0.0
    %1350 = vmatpush2.msra.mxu0 0.0
    %1351 = vmatprep.subr.mxu0 0.0
    %1352 = vmatpush2.msra.mxu0 0.0
    %1353 = vmatprep.subr.mxu0 0.0
    %1354 = vmatpush2.msra.mxu0 0.0
    %1355 = vmatprep.subr.mxu0 0.0
    %1356 = vmatpush2.msra.mxu0 0.0
    %1357 = vmatprep.subr.mxu0 0.0
    %1358 = vmatpush2.msra.mxu0 0.0
    %1359 = vmatprep.subr.mxu0 0.0
    %1360 = vmatpush2.msra.mxu0 0.0
    %1361 = vmatprep.subr.mxu0 0.0
    %1362 = vmatpush2.msra.mxu0 0.0
    %1363 = vmatprep.subr.mxu0 0.0
    %1364 = vmatpush2.msra.mxu0 0.0
    %1365 = vmatprep.subr.mxu0 0.0
    %1366 = vmatpush2.msra.mxu0 0.0
    %1367 = vmatprep.mubr.f32.mxu0 0.0
    %1368 = vmatmul.mubr.f32.gmra.mxu0 %v1301
    %v1369 = vpop.f32.mrf.mxu0
    %v1370 = vadd.f32 0.0, %v1369
    %v1371 = vpop.f32.mrf.mxu0
    %1372 = vdwg.mxu0
    %v1374 = vsel %vm117, %v1221, 0
    %1376 = vmatprep.subr.mxu0 0.0
    %1377 = vmatpush1.msra.mxu0 0.0
    %1378 = vmatprep.subr.mxu0 0.0
    %1379 = vmatpush1.msra.mxu0 0.0
    %1380 = vmatprep.subr.mxu0 0.0
    %1381 = vmatpush1.msra.mxu0 0.0
    %1382 = vmatprep.subr.mxu0 0.0
    %1383 = vmatpush1.msra.mxu0 0.0
    %1384 = vmatprep.subr.mxu0 0.0
    %1385 = vmatpush1.msra.mxu0 0.0
    %1386 = vmatprep.subr.mxu0 0.0
    %1387 = vmatpush1.msra.mxu0 0.0
    %1388 = vmatprep.subr.mxu0 0.0
    %1389 = vmatpush1.msra.mxu0 0.0
    %1390 = vmatprep.subr.mxu0 0.0
    %1391 = vmatpush1.msra.mxu0 0.0
    %1392 = vmatprep.subr.mxu0 0.0
    %1393 = vmatpush1.msra.mxu0 0.0
    %1394 = vmatprep.subr.mxu0 0.0
    %1395 = vmatpush1.msra.mxu0 0.0
    %1396 = vmatprep.subr.mxu0 0.0
    %1397 = vmatpush1.msra.mxu0 0.0
    %1398 = vmatprep.subr.mxu0 0.0
    %1399 = vmatpush1.msra.mxu0 0.0
    %1400 = vmatprep.subr.mxu0 0.0
    %1401 = vmatpush1.msra.mxu0 0.0
    %1402 = vmatprep.subr.mxu0 0.0
    %1403 = vmatpush1.msra.mxu0 0.0
    %1404 = vmatprep.subr.mxu0 0.0
    %1405 = vmatpush1.msra.mxu0 0.0
    %1406 = vmatprep.subr.mxu0 0.0
    %1407 = vmatpush1.msra.mxu0 %v219
    %1408 = vmatprep.subr.mxu0 0.0
    %1409 = vmatpush2.msra.mxu0 0.0
    %1410 = vmatprep.subr.mxu0 0.0
    %1411 = vmatpush2.msra.mxu0 0.0
    %1412 = vmatprep.subr.mxu0 0.0
    %1413 = vmatpush2.msra.mxu0 0.0
    %1414 = vmatprep.subr.mxu0 0.0
    %1415 = vmatpush2.msra.mxu0 0.0
    %1416 = vmatprep.subr.mxu0 0.0
    %1417 = vmatpush2.msra.mxu0 0.0
    %1418 = vmatprep.subr.mxu0 0.0
    %1419 = vmatpush2.msra.mxu0 0.0
    %1420 = vmatprep.subr.mxu0 0.0
    %1421 = vmatpush2.msra.mxu0 0.0
    %1422 = vmatprep.subr.mxu0 0.0
    %1423 = vmatpush2.msra.mxu0 0.0
    %1424 = vmatprep.subr.mxu0 0.0
    %1425 = vmatpush2.msra.mxu0 0.0
    %1426 = vmatprep.subr.mxu0 0.0
    %1427 = vmatpush2.msra.mxu0 0.0
    %1428 = vmatprep.subr.mxu0 0.0
    %1429 = vmatpush2.msra.mxu0 0.0
    %1430 = vmatprep.subr.mxu0 0.0
    %1431 = vmatpush2.msra.mxu0 0.0
    %1432 = vmatprep.subr.mxu0 0.0
    %1433 = vmatpush2.msra.mxu0 0.0
    %1434 = vmatprep.subr.mxu0 0.0
    %1435 = vmatpush2.msra.mxu0 0.0
    %1436 = vmatprep.subr.mxu0 0.0
    %1437 = vmatpush2.msra.mxu0 0.0
    %1438 = vmatprep.subr.mxu0 0.0
    %1439 = vmatpush2.msra.mxu0 0.0
    %1440 = vmatprep.mubr.f32.mxu0 0.0
    %1441 = vmatmul.mubr.f32.gmra.mxu0 %v1374
    %v1442 = vpop.f32.mrf.mxu0
    %v1443 = vadd.f32 0.0, %v1442
    %v1444 = vpop.f32.mrf.mxu0
    %1445 = vdwg.mxu0
    %v1447 = vsel %vm117, %v1222, 0
    %1449 = vmatprep.subr.mxu0 0.0
    %1450 = vmatpush1.msra.mxu0 0.0
    %1451 = vmatprep.subr.mxu0 0.0
    %1452 = vmatpush1.msra.mxu0 0.0
    %1453 = vmatprep.subr.mxu0 0.0
    %1454 = vmatpush1.msra.mxu0 0.0
    %1455 = vmatprep.subr.mxu0 0.0
    %1456 = vmatpush1.msra.mxu0 0.0
    %1457 = vmatprep.subr.mxu0 0.0
    %1458 = vmatpush1.msra.mxu0 0.0
    %1459 = vmatprep.subr.mxu0 0.0
    %1460 = vmatpush1.msra.mxu0 0.0
    %1461 = vmatprep.subr.mxu0 0.0
    %1462 = vmatpush1.msra.mxu0 0.0
    %1463 = vmatprep.subr.mxu0 0.0
    %1464 = vmatpush1.msra.mxu0 0.0
    %1465 = vmatprep.subr.mxu0 0.0
    %1466 = vmatpush1.msra.mxu0 0.0
    %1467 = vmatprep.subr.mxu0 0.0
    %1468 = vmatpush1.msra.mxu0 0.0
    %1469 = vmatprep.subr.mxu0 0.0
    %1470 = vmatpush1.msra.mxu0 0.0
    %1471 = vmatprep.subr.mxu0 0.0
    %1472 = vmatpush1.msra.mxu0 0.0
    %1473 = vmatprep.subr.mxu0 0.0
    %1474 = vmatpush1.msra.mxu0 0.0
    %1475 = vmatprep.subr.mxu0 0.0
    %1476 = vmatpush1.msra.mxu0 0.0
    %1477 = vmatprep.subr.mxu0 0.0
    %1478 = vmatpush1.msra.mxu0 0.0
    %1479 = vmatprep.subr.mxu0 0.0
    %1480 = vmatpush1.msra.mxu0 %v224
    %1481 = vmatprep.subr.mxu0 0.0
    %1482 = vmatpush2.msra.mxu0 0.0
    %1483 = vmatprep.subr.mxu0 0.0
    %1484 = vmatpush2.msra.mxu0 0.0
    %1485 = vmatprep.subr.mxu0 0.0
    %1486 = vmatpush2.msra.mxu0 0.0
    %1487 = vmatprep.subr.mxu0 0.0
    %1488 = vmatpush2.msra.mxu0 0.0
    %1489 = vmatprep.subr.mxu0 0.0
    %1490 = vmatpush2.msra.mxu0 0.0
    %1491 = vmatprep.subr.mxu0 0.0
    %1492 = vmatpush2.msra.mxu0 0.0
    %1493 = vmatprep.subr.mxu0 0.0
    %1494 = vmatpush2.msra.mxu0 0.0
    %1495 = vmatprep.subr.mxu0 0.0
    %1496 = vmatpush2.msra.mxu0 0.0
    %1497 = vmatprep.subr.mxu0 0.0
    %1498 = vmatpush2.msra.mxu0 0.0
    %1499 = vmatprep.subr.mxu0 0.0
    %1500 = vmatpush2.msra.mxu0 0.0
    %1501 = vmatprep.subr.mxu0 0.0
    %1502 = vmatpush2.msra.mxu0 0.0
    %1503 = vmatprep.subr.mxu0 0.0
    %1504 = vmatpush2.msra.mxu0 0.0
    %1505 = vmatprep.subr.mxu0 0.0
    %1506 = vmatpush2.msra.mxu0 0.0
    %1507 = vmatprep.subr.mxu0 0.0
    %1508 = vmatpush2.msra.mxu0 0.0
    %1509 = vmatprep.subr.mxu0 0.0
    %1510 = vmatpush2.msra.mxu0 0.0
    %1511 = vmatprep.subr.mxu0 0.0
    %1512 = vmatpush2.msra.mxu0 0.0
    %1513 = vmatprep.mubr.f32.mxu0 0.0
    %1514 = vmatmul.mubr.f32.gmra.mxu0 %v1447
    %v1515 = vpop.f32.mrf.mxu0
    %v1516 = vadd.f32 0.0, %v1515
    %v1517 = vpop.f32.mrf.mxu0
    %1518 = vdwg.mxu0
    %v1520 = vsel %vm117, %v1223, 0
    %1522 = vmatprep.subr.mxu0 0.0
    %1523 = vmatpush1.msra.mxu0 0.0
    %1524 = vmatprep.subr.mxu0 0.0
    %1525 = vmatpush1.msra.mxu0 0.0
    %1526 = vmatprep.subr.mxu0 0.0
    %1527 = vmatpush1.msra.mxu0 0.0
    %1528 = vmatprep.subr.mxu0 0.0
    %1529 = vmatpush1.msra.mxu0 0.0
    %1530 = vmatprep.subr.mxu0 0.0
    %1531 = vmatpush1.msra.mxu0 0.0
    %1532 = vmatprep.subr.mxu0 0.0
    %1533 = vmatpush1.msra.mxu0 0.0
    %1534 = vmatprep.subr.mxu0 0.0
    %1535 = vmatpush1.msra.mxu0 0.0
    %1536 = vmatprep.subr.mxu0 0.0
    %1537 = vmatpush1.msra.mxu0 0.0
    %1538 = vmatprep.subr.mxu0 0.0
    %1539 = vmatpush1.msra.mxu0 0.0
    %1540 = vmatprep.subr.mxu0 0.0
    %1541 = vmatpush1.msra.mxu0 0.0
    %1542 = vmatprep.subr.mxu0 0.0
    %1543 = vmatpush1.msra.mxu0 0.0
    %1544 = vmatprep.subr.mxu0 0.0
    %1545 = vmatpush1.msra.mxu0 0.0
    %1546 = vmatprep.subr.mxu0 0.0
    %1547 = vmatpush1.msra.mxu0 0.0
    %1548 = vmatprep.subr.mxu0 0.0
    %1549 = vmatpush1.msra.mxu0 0.0
    %1550 = vmatprep.subr.mxu0 0.0
    %1551 = vmatpush1.msra.mxu0 0.0
    %1552 = vmatprep.subr.mxu0 0.0
    %1553 = vmatpush1.msra.mxu0 %v229
    %1554 = vmatprep.subr.mxu0 0.0
    %1555 = vmatpush2.msra.mxu0 0.0
    %1556 = vmatprep.subr.mxu0 0.0
    %1557 = vmatpush2.msra.mxu0 0.0
    %1558 = vmatprep.subr.mxu0 0.0
    %1559 = vmatpush2.msra.mxu0 0.0
    %1560 = vmatprep.subr.mxu0 0.0
    %1561 = vmatpush2.msra.mxu0 0.0
    %1562 = vmatprep.subr.mxu0 0.0
    %1563 = vmatpush2.msra.mxu0 0.0
    %1564 = vmatprep.subr.mxu0 0.0
    %1565 = vmatpush2.msra.mxu0 0.0
    %1566 = vmatprep.subr.mxu0 0.0
    %1567 = vmatpush2.msra.mxu0 0.0
    %1568 = vmatprep.subr.mxu0 0.0
    %1569 = vmatpush2.msra.mxu0 0.0
    %1570 = vmatprep.subr.mxu0 0.0
    %1571 = vmatpush2.msra.mxu0 0.0
    %1572 = vmatprep.subr.mxu0 0.0
    %1573 = vmatpush2.msra.mxu0 0.0
    %1574 = vmatprep.subr.mxu0 0.0
    %1575 = vmatpush2.msra.mxu0 0.0
    %1576 = vmatprep.subr.mxu0 0.0
    %1577 = vmatpush2.msra.mxu0 0.0
    %1578 = vmatprep.subr.mxu0 0.0
    %1579 = vmatpush2.msra.mxu0 0.0
    %1580 = vmatprep.subr.mxu0 0.0
    %1581 = vmatpush2.msra.mxu0 0.0
    %1582 = vmatprep.subr.mxu0 0.0
    %1583 = vmatpush2.msra.mxu0 0.0
    %1584 = vmatprep.subr.mxu0 0.0
    %1585 = vmatpush2.msra.mxu0 0.0
    %1586 = vmatprep.mubr.f32.mxu0 0.0
    %1587 = vmatmul.mubr.f32.gmra.mxu0 %v1520
    %v1588 = vpop.f32.mrf.mxu0
    %v1589 = vadd.f32 0.0, %v1588
    %v1590 = vpop.f32.mrf.mxu0
    %1591 = vdwg.mxu0
    %v1593 = vsel %vm117, %v1224, 0
    %1595 = vmatprep.subr.mxu0 0.0
    %1596 = vmatpush1.msra.mxu0 0.0
    %1597 = vmatprep.subr.mxu0 0.0
    %1598 = vmatpush1.msra.mxu0 0.0
    %1599 = vmatprep.subr.mxu0 0.0
    %1600 = vmatpush1.msra.mxu0 0.0
    %1601 = vmatprep.subr.mxu0 0.0
    %1602 = vmatpush1.msra.mxu0 0.0
    %1603 = vmatprep.subr.mxu0 0.0
    %1604 = vmatpush1.msra.mxu0 0.0
    %1605 = vmatprep.subr.mxu0 0.0
    %1606 = vmatpush1.msra.mxu0 0.0
    %1607 = vmatprep.subr.mxu0 0.0
    %1608 = vmatpush1.msra.mxu0 0.0
    %1609 = vmatprep.subr.mxu0 0.0
    %1610 = vmatpush1.msra.mxu0 0.0
    %1611 = vmatprep.subr.mxu0 0.0
    %1612 = vmatpush1.msra.mxu0 0.0
    %1613 = vmatprep.subr.mxu0 0.0
    %1614 = vmatpush1.msra.mxu0 0.0
    %1615 = vmatprep.subr.mxu0 0.0
    %1616 = vmatpush1.msra.mxu0 0.0
    %1617 = vmatprep.subr.mxu0 0.0
    %1618 = vmatpush1.msra.mxu0 0.0
    %1619 = vmatprep.subr.mxu0 0.0
    %1620 = vmatpush1.msra.mxu0 0.0
    %1621 = vmatprep.subr.mxu0 0.0
    %1622 = vmatpush1.msra.mxu0 0.0
    %1623 = vmatprep.subr.mxu0 0.0
    %1624 = vmatpush1.msra.mxu0 0.0
    %1625 = vmatprep.subr.mxu0 0.0
    %1626 = vmatpush1.msra.mxu0 %v234
    %1627 = vmatprep.subr.mxu0 0.0
    %1628 = vmatpush2.msra.mxu0 0.0
    %1629 = vmatprep.subr.mxu0 0.0
    %1630 = vmatpush2.msra.mxu0 0.0
    %1631 = vmatprep.subr.mxu0 0.0
    %1632 = vmatpush2.msra.mxu0 0.0
    %1633 = vmatprep.subr.mxu0 0.0
    %1634 = vmatpush2.msra.mxu0 0.0
    %1635 = vmatprep.subr.mxu0 0.0
    %1636 = vmatpush2.msra.mxu0 0.0
    %1637 = vmatprep.subr.mxu0 0.0
    %1638 = vmatpush2.msra.mxu0 0.0
    %1639 = vmatprep.subr.mxu0 0.0
    %1640 = vmatpush2.msra.mxu0 0.0
    %1641 = vmatprep.subr.mxu0 0.0
    %1642 = vmatpush2.msra.mxu0 0.0
    %1643 = vmatprep.subr.mxu0 0.0
    %1644 = vmatpush2.msra.mxu0 0.0
    %1645 = vmatprep.subr.mxu0 0.0
    %1646 = vmatpush2.msra.mxu0 0.0
    %1647 = vmatprep.subr.mxu0 0.0
    %1648 = vmatpush2.msra.mxu0 0.0
    %1649 = vmatprep.subr.mxu0 0.0
    %1650 = vmatpush2.msra.mxu0 0.0
    %1651 = vmatprep.subr.mxu0 0.0
    %1652 = vmatpush2.msra.mxu0 0.0
    %1653 = vmatprep.subr.mxu0 0.0
    %1654 = vmatpush2.msra.mxu0 0.0
    %1655 = vmatprep.subr.mxu0 0.0
    %1656 = vmatpush2.msra.mxu0 0.0
    %1657 = vmatprep.subr.mxu0 0.0
    %1658 = vmatpush2.msra.mxu0 0.0
    %1659 = vmatprep.mubr.f32.mxu0 0.0
    %1660 = vmatmul.mubr.f32.gmra.mxu0 %v1593
    %v1661 = vpop.f32.mrf.mxu0
    %v1662 = vadd.f32 0.0, %v1661
    %v1663 = vpop.f32.mrf.mxu0
    %1664 = vdwg.mxu0
    %v1666 = vsel %vm117, %v1225, 0
    %1668 = vmatprep.subr.mxu0 0.0
    %1669 = vmatpush1.msra.mxu0 0.0
    %1670 = vmatprep.subr.mxu0 0.0
    %1671 = vmatpush1.msra.mxu0 0.0
    %1672 = vmatprep.subr.mxu0 0.0
    %1673 = vmatpush1.msra.mxu0 0.0
    %1674 = vmatprep.subr.mxu0 0.0
    %1675 = vmatpush1.msra.mxu0 0.0
    %1676 = vmatprep.subr.mxu0 0.0
    %1677 = vmatpush1.msra.mxu0 0.0
    %1678 = vmatprep.subr.mxu0 0.0
    %1679 = vmatpush1.msra.mxu0 0.0
    %1680 = vmatprep.subr.mxu0 0.0
    %1681 = vmatpush1.msra.mxu0 0.0
    %1682 = vmatprep.subr.mxu0 0.0
    %1683 = vmatpush1.msra.mxu0 0.0
    %1684 = vmatprep.subr.mxu0 0.0
    %1685 = vmatpush1.msra.mxu0 0.0
    %1686 = vmatprep.subr.mxu0 0.0
    %1687 = vmatpush1.msra.mxu0 0.0
    %1688 = vmatprep.subr.mxu0 0.0
    %1689 = vmatpush1.msra.mxu0 0.0
    %1690 = vmatprep.subr.mxu0 0.0
    %1691 = vmatpush1.msra.mxu0 0.0
    %1692 = vmatprep.subr.mxu0 0.0
    %1693 = vmatpush1.msra.mxu0 0.0
    %1694 = vmatprep.subr.mxu0 0.0
    %1695 = vmatpush1.msra.mxu0 0.0
    %1696 = vmatprep.subr.mxu0 0.0
    %1697 = vmatpush1.msra.mxu0 0.0
    %1698 = vmatprep.subr.mxu0 0.0
    %1699 = vmatpush1.msra.mxu0 %v239
    %1700 = vmatprep.subr.mxu0 0.0
    %1701 = vmatpush2.msra.mxu0 0.0
    %1702 = vmatprep.subr.mxu0 0.0
    %1703 = vmatpush2.msra.mxu0 0.0
    %1704 = vmatprep.subr.mxu0 0.0
    %1705 = vmatpush2.msra.mxu0 0.0
    %1706 = vmatprep.subr.mxu0 0.0
    %1707 = vmatpush2.msra.mxu0 0.0
    %1708 = vmatprep.subr.mxu0 0.0
    %1709 = vmatpush2.msra.mxu0 0.0
    %1710 = vmatprep.subr.mxu0 0.0
    %1711 = vmatpush2.msra.mxu0 0.0
    %1712 = vmatprep.subr.mxu0 0.0
    %1713 = vmatpush2.msra.mxu0 0.0
    %1714 = vmatprep.subr.mxu0 0.0
    %1715 = vmatpush2.msra.mxu0 0.0
    %1716 = vmatprep.subr.mxu0 0.0
    %1717 = vmatpush2.msra.mxu0 0.0
    %1718 = vmatprep.subr.mxu0 0.0
    %1719 = vmatpush2.msra.mxu0 0.0
    %1720 = vmatprep.subr.mxu0 0.0
    %1721 = vmatpush2.msra.mxu0 0.0
    %1722 = vmatprep.subr.mxu0 0.0
    %1723 = vmatpush2.msra.mxu0 0.0
    %1724 = vmatprep.subr.mxu0 0.0
    %1725 = vmatpush2.msra.mxu0 0.0
    %1726 = vmatprep.subr.mxu0 0.0
    %1727 = vmatpush2.msra.mxu0 0.0
    %1728 = vmatprep.subr.mxu0 0.0
    %1729 = vmatpush2.msra.mxu0 0.0
    %1730 = vmatprep.subr.mxu0 0.0
    %1731 = vmatpush2.msra.mxu0 0.0
    %1732 = vmatprep.mubr.f32.mxu0 0.0
    %1733 = vmatmul.mubr.f32.gmra.mxu0 %v1666
    %v1734 = vpop.f32.mrf.mxu0
    %v1735 = vadd.f32 0.0, %v1734
    %v1736 = vpop.f32.mrf.mxu0
    %1737 = vdwg.mxu0
    %v1739 = vsel %vm117, %v1226, 0
    %1741 = vmatprep.subr.mxu0 0.0
    %1742 = vmatpush1.msra.mxu0 0.0
    %1743 = vmatprep.subr.mxu0 0.0
    %1744 = vmatpush1.msra.mxu0 0.0
    %1745 = vmatprep.subr.mxu0 0.0
    %1746 = vmatpush1.msra.mxu0 0.0
    %1747 = vmatprep.subr.mxu0 0.0
    %1748 = vmatpush1.msra.mxu0 0.0
    %1749 = vmatprep.subr.mxu0 0.0
    %1750 = vmatpush1.msra.mxu0 0.0
    %1751 = vmatprep.subr.mxu0 0.0
    %1752 = vmatpush1.msra.mxu0 0.0
    %1753 = vmatprep.subr.mxu0 0.0
    %1754 = vmatpush1.msra.mxu0 0.0
    %1755 = vmatprep.subr.mxu0 0.0
    %1756 = vmatpush1.msra.mxu0 0.0
    %1757 = vmatprep.subr.mxu0 0.0
    %1758 = vmatpush1.msra.mxu0 0.0
    %1759 = vmatprep.subr.mxu0 0.0
    %1760 = vmatpush1.msra.mxu0 0.0
    %1761 = vmatprep.subr.mxu0 0.0
    %1762 = vmatpush1.msra.mxu0 0.0
    %1763 = vmatprep.subr.mxu0 0.0
    %1764 = vmatpush1.msra.mxu0 0.0
    %1765 = vmatprep.subr.mxu0 0.0
    %1766 = vmatpush1.msra.mxu0 0.0
    %1767 = vmatprep.subr.mxu0 0.0
    %1768 = vmatpush1.msra.mxu0 0.0
    %1769 = vmatprep.subr.mxu0 0.0
    %1770 = vmatpush1.msra.mxu0 0.0
    %1771 = vmatprep.subr.mxu0 0.0
    %1772 = vmatpush1.msra.mxu0 %v244
    %1773 = vmatprep.subr.mxu0 0.0
    %1774 = vmatpush2.msra.mxu0 0.0
    %1775 = vmatprep.subr.mxu0 0.0
    %1776 = vmatpush2.msra.mxu0 0.0
    %1777 = vmatprep.subr.mxu0 0.0
    %1778 = vmatpush2.msra.mxu0 0.0
    %1779 = vmatprep.subr.mxu0 0.0
    %1780 = vmatpush2.msra.mxu0 0.0
    %1781 = vmatprep.subr.mxu0 0.0
    %1782 = vmatpush2.msra.mxu0 0.0
    %1783 = vmatprep.subr.mxu0 0.0
    %1784 = vmatpush2.msra.mxu0 0.0
    %1785 = vmatprep.subr.mxu0 0.0
    %1786 = vmatpush2.msra.mxu0 0.0
    %1787 = vmatprep.subr.mxu0 0.0
    %1788 = vmatpush2.msra.mxu0 0.0
    %1789 = vmatprep.subr.mxu0 0.0
    %1790 = vmatpush2.msra.mxu0 0.0
    %1791 = vmatprep.subr.mxu0 0.0
    %1792 = vmatpush2.msra.mxu0 0.0
    %1793 = vmatprep.subr.mxu0 0.0
    %1794 = vmatpush2.msra.mxu0 0.0
    %1795 = vmatprep.subr.mxu0 0.0
    %1796 = vmatpush2.msra.mxu0 0.0
    %1797 = vmatprep.subr.mxu0 0.0
    %1798 = vmatpush2.msra.mxu0 0.0
    %1799 = vmatprep.subr.mxu0 0.0
    %1800 = vmatpush2.msra.mxu0 0.0
    %1801 = vmatprep.subr.mxu0 0.0
    %1802 = vmatpush2.msra.mxu0 0.0
    %1803 = vmatprep.subr.mxu0 0.0
    %1804 = vmatpush2.msra.mxu0 0.0
    %1805 = vmatprep.mubr.f32.mxu0 0.0
    %1806 = vmatmul.mubr.f32.gmra.mxu0 %v1739
    %v1807 = vpop.f32.mrf.mxu0
    %v1808 = vadd.f32 0.0, %v1807
    %v1809 = vpop.f32.mrf.mxu0
    %1810 = vdwg.mxu0
    %1811 = vst.msk [vmem:[#allocation2] sm:$0xff] %vm117, %v1297
    %1812 = vst.msk [vmem:[#allocation2 + $0x8] sm:$0xff] %vm117, %v1589
    %1815 = vrot.lane.b32.xlu0 %v1370, 8
    %v1816 = vpop.permute.xlu0 %1815
    %1817 = vrot.lane.b32.xlu0 %v1662, 8
    %v1818 = vpop.permute.xlu0 %1817
    %vm1821 = vcmask 130112
    %1822 = vst.msk [vmem:[#allocation2] sm:$0xff] %vm1821, %v1816
    %1823 = vst.msk [vmem:[#allocation2 + $0x8] sm:$0xff] %vm1821, %v1818
    %1826 = vrot.lane.b32.xlu0 %v1443, 16
    %v1827 = vpop.permute.xlu0 %1826
    %1828 = vrot.lane.b32.xlu0 %v1735, 16
    %v1829 = vpop.permute.xlu0 %1828
    %vm1832 = vcmask 195712
    %1833 = vst.msk [vmem:[#allocation2] sm:$0xff] %vm1832, %v1827
    %1834 = vst.msk [vmem:[#allocation2 + $0x8] sm:$0xff] %vm1832, %v1829
    %1837 = vrot.lane.b32.xlu0 %v1516, 24
    %v1838 = vpop.permute.xlu0 %1837
    %1839 = vrot.lane.b32.xlu0 %v1808, 24
    %v1840 = vpop.permute.xlu0 %1839
    %vm1843 = vcmask 261312
    %1844 = vst.msk [vmem:[#allocation2] sm:$0xff] %vm1843, %v1838
    %1845 = vst.msk [vmem:[#allocation2 + $0x8] sm:$0xff] %vm1843, %v1840
    %v1846 = vld [vmem:[#allocation2] sm:$0xff]
    %v1847 = vld [vmem:[#allocation2 + $0x8] sm:$0xff]
    %v1848 = vld [vmem:[#allocation12] sm:$0xff]
    %v1849 = vld [vmem:[#allocation12 + $0x8] sm:$0xff]
    %v1850 = vld [vmem:[#allocation12 + $0x10] sm:$0xff]
    %v1851 = vld [vmem:[#allocation12 + $0x18] sm:$0xff]
    %v1852 = vld [vmem:[%s7] sm:$0x1]
    %v1854 = vlaneseq
    %v1855 = vshrl.u32 %v1854, 7
    %v1856 = vsub.s32 0, %v1855
    %v1857 = vrot.slane %v1852, %v1856
    %vm1859 = vcmask 261120
    %v1861 = vsel %vm1859, %v1846, 0
    %v1864 = vsel %vm1859, %v1847, 0
    %1866 = vmatprep.subr.mxu0 0.0
    %1867 = vmatpush1.msra.mxu0 0.0
    %1868 = vmatprep.subr.mxu0 0.0
    %1869 = vmatpush1.msra.mxu0 0.0
    %1870 = vmatprep.subr.mxu0 0.0
    %1871 = vmatpush1.msra.mxu0 0.0
    %1872 = vmatprep.subr.mxu0 0.0
    %1873 = vmatpush1.msra.mxu0 0.0
    %1874 = vmatprep.subr.mxu0 0.0
    %1875 = vmatpush1.msra.mxu0 0.0
    %1876 = vmatprep.subr.mxu0 0.0
    %1877 = vmatpush1.msra.mxu0 0.0
    %1878 = vmatprep.subr.mxu0 0.0
    %1879 = vmatpush1.msra.mxu0 0.0
    %1880 = vmatprep.subr.mxu0 0.0
    %1881 = vmatpush1.msra.mxu0 0.0
    %1882 = vmatprep.subr.mxu0 0.0
    %1883 = vmatpush1.msra.mxu0 0.0
    %1884 = vmatprep.subr.mxu0 0.0
    %1885 = vmatpush1.msra.mxu0 0.0
    %1886 = vmatprep.subr.mxu0 0.0
    %1887 = vmatpush1.msra.mxu0 0.0
    %1888 = vmatprep.subr.mxu0 0.0
    %1889 = vmatpush1.msra.mxu0 0.0
    %1890 = vmatprep.subr.mxu0 0.0
    %1891 = vmatpush1.msra.mxu0 %v1851
    %1892 = vmatprep.subr.mxu0 0.0
    %1893 = vmatpush1.msra.mxu0 %v1850
    %1894 = vmatprep.subr.mxu0 0.0
    %1895 = vmatpush1.msra.mxu0 %v1849
    %1896 = vmatprep.subr.mxu0 0.0
    %1897 = vmatpush1.msra.mxu0 %v1848
    %1898 = vmatprep.subr.mxu0 0.0
    %1899 = vmatpush2.msra.mxu0 0.0
    %1900 = vmatprep.subr.mxu0 0.0
    %1901 = vmatpush2.msra.mxu0 0.0
    %1902 = vmatprep.subr.mxu0 0.0
    %1903 = vmatpush2.msra.mxu0 0.0
    %1904 = vmatprep.subr.mxu0 0.0
    %1905 = vmatpush2.msra.mxu0 0.0
    %1906 = vmatprep.subr.mxu0 0.0
    %1907 = vmatpush2.msra.mxu0 0.0
    %1908 = vmatprep.subr.mxu0 0.0
    %1909 = vmatpush2.msra.mxu0 0.0
    %1910 = vmatprep.subr.mxu0 0.0
    %1911 = vmatpush2.msra.mxu0 0.0
    %1912 = vmatprep.subr.mxu0 0.0
    %1913 = vmatpush2.msra.mxu0 0.0
    %1914 = vmatprep.subr.mxu0 0.0
    %1915 = vmatpush2.msra.mxu0 0.0
    %1916 = vmatprep.subr.mxu0 0.0
    %1917 = vmatpush2.msra.mxu0 0.0
    %1918 = vmatprep.subr.mxu0 0.0
    %1919 = vmatpush2.msra.mxu0 0.0
    %1920 = vmatprep.subr.mxu0 0.0
    %1921 = vmatpush2.msra.mxu0 0.0
    %1922 = vmatprep.subr.mxu0 0.0
    %1923 = vmatpush2.msra.mxu0 0.0
    %1924 = vmatprep.subr.mxu0 0.0
    %1925 = vmatpush2.msra.mxu0 0.0
    %1926 = vmatprep.subr.mxu0 0.0
    %1927 = vmatpush2.msra.mxu0 0.0
    %1928 = vmatprep.subr.mxu0 0.0
    %1929 = vmatpush2.msra.mxu0 0.0
    %1930 = vmatprep.mubr.f32.mxu0 0.0
    %1931 = vmatmul.mubr.f32.gmra.mxu0 %v1861
    %v1932 = vpop.f32.mrf.mxu0
    %v1933 = vadd.f32 %v1857, %v1932
    %v1934 = vpop.f32.mrf.mxu0
    %1935 = vmatprep.mubr.f32.mxu0 0.0
    %1936 = vmatmul.mubr.f32.gmra.mxu0 %v1864
    %v1937 = vpop.f32.mrf.mxu0
    %v1938 = vadd.f32 %v1857, %v1937
    %v1939 = vpop.f32.mrf.mxu0
    %1940 = vdwg.mxu0
    %1941 = vst.msk [vmem:[#allocation14] sm:$0xff] %vm1859, %v1933
    %1942 = vst.msk [vmem:[#allocation14 + $0x8] sm:$0xff] %vm1859, %v1938
    // Predicated region
    $region58: #{tpu_custom_call.1} parent=1 // pred_check
      _
    $region59: #{tpu_custom_call.1} parent=1 // pred_check_branch
      %1944 = sbr.rel (0) target = $region61
    $region60: #{tpu_custom_call.1} parent=1 // pred_region
      %s1946 = ssub.s32 256, 256
      %1947 = vsyncadd [#allocation5], %s1946
      %s1948 = sshll.u32 [#allocation14], 4
      %s1949 = int_to_ptr.vmem [resolvable:$true] %s1948
      %1954 = dma.vmem_to_hbm [thread:$0]  %s1949, 256, %s8, [#allocation5], 128, 128, 8
    $region61: #{tpu_custom_call.1} parent=1 // pred_fallthru
      _
    // Predicated region
    $region62: #{tpu_custom_call.1} parent=1 // pred_check
      _
    $region63: #{tpu_custom_call.1} parent=1 // pred_check_branch
      %1956 = sbr.rel (0) target = $region65
    $region64: #{tpu_custom_call.1} parent=1 // pred_region
      %1957 = dma.done [#allocation5], 256
    $region65: #{tpu_custom_call.1} parent=1 // pred_fallthru
      _
    %1958 = vsyncpa [#allocation4], 1
    %1959 = vsyncpa [#allocation7], 1
    %1960 = vsyncpa [#allocation10], 1
    %1961 = vsyncpa [#allocation13], 1
    %1962 = vsyncpa [#allocation5], 1

</llo_original>
